<compile_context>
chip_gen: v6e
topology: v6e:2x2x1
jax: 0.10.0
libtpu: 0.0.40
codegen_flags: <defaults>
</compile_context>

<pallas_src>
import math
import jax
import jax.numpy as jnp
from jax.experimental import pallas as pl
from jax.experimental.pallas import tpu as pltpu


def make_rnn_kernel(num_layers: int, seq_len: int, batch: int):
    """Kernel refs (in order):
        x (T*B, D) time-major,
        W_ih0_T (D, H), W_hh0_T (H, H), b0 (1, H),
        [W_cat_l (2H, H), b_l (1, H)] for l = 1..L-1,
        W_fc_T (H, O), b_fc (1, O),
        out (B, O)
    """

    def kernel(x_ref, w_ih0_ref, w_hh0_ref, b0_ref, *refs):
        n_rest = 2 * (num_layers - 1)
        layer_refs = refs[:n_rest]
        w_fc_ref = refs[n_rest]
        b_fc_ref = refs[n_rest + 1]
        out_ref = refs[n_rest + 2]

        hidden = w_hh0_ref.shape[0]

        # Hoisted layer-0 input projection: one (T*B, D) @ (D, H) matmul with
        # the fused bias folded in (single broadcast, outside any loop).
        x_proj = (
            jnp.dot(x_ref[...], w_ih0_ref[...], preferred_element_type=jnp.float32)
            + b0_ref[...]
        )                                                       # (T*B, H)

        w_hh0 = w_hh0_ref[...]                                  # (H, H)

        # Load stacked weights / biases for layers >= 1 once; hoist the bias
        # broadcast out of the timestep loop.
        w_cat = []
        b_bcast = []
        for l in range(1, num_layers):
            w_cat.append(layer_refs[2 * (l - 1)][...])          # (2H, H)
            b_bcast.append(
                jnp.broadcast_to(layer_refs[2 * (l - 1) + 1][...], (batch, hidden))
            )

        h = [jnp.zeros((batch, hidden), jnp.float32) for _ in range(num_layers)]

        # Wavefront interleave over the stacked layers: for each t compute
        # h0_t, then h1_t (needs only h0_t and h1_{t-1}), ...  Fully unrolled
        # (T is tiny); one MXU push per layer per step on the serial path.
        # TODO(synk): for non-toy seq_len switch this to
        #   lax.fori_loop(..., unroll=small_k) with x_proj staged in a VMEM
        #   scratch to bound vreg live ranges.
        for t in range(seq_len):
            x_t = x_proj[t * batch:(t + 1) * batch, :]          # contiguous rows
            h[0] = jnp.tanh(
                x_t + jnp.dot(h[0], w_hh0, preferred_element_type=jnp.float32)
            )
            for l in range(1, num_layers):
                cat = jnp.concatenate([h[l - 1], h[l]], axis=-1)   # (B, 2H)
                h[l] = jnp.tanh(
                    jnp.dot(cat, w_cat[l - 1], preferred_element_type=jnp.float32)
                    + b_bcast[l - 1]
                )

        # FC head on the final hidden state of the last layer.
        out_ref[...] = (
            jnp.dot(h[num_layers - 1], w_fc_ref[...],
                    preferred_element_type=jnp.float32)
            + b_fc_ref[...]
        )

    return kernel


def init_params(key, input_size, hidden_size, num_layers, output_size):
    """Deterministic init mimicking PyTorch uniform(-1/sqrt(H), 1/sqrt(H))."""
    k = 1.0 / math.sqrt(hidden_size)
    layers = []
    for l in range(num_layers):
        in_l = input_size if l == 0 else hidden_size
        key, k1, k2, k3, k4 = jax.random.split(key, 5)
        layers.append(
            dict(
                W_ih=jax.random.uniform(k1, (hidden_size, in_l), jnp.float32, -k, k),
                W_hh=jax.random.uniform(k2, (hidden_size, hidden_size), jnp.float32, -k, k),
                b_ih=jax.random.uniform(k3, (hidden_size,), jnp.float32, -k, k),
                b_hh=jax.random.uniform(k4, (hidden_size,), jnp.float32, -k, k),
            )
        )
    key, k5, k6 = jax.random.split(key, 3)
    kf = 1.0 / math.sqrt(hidden_size)
    W_fc = jax.random.uniform(k5, (output_size, hidden_size), jnp.float32, -kf, kf)
    b_fc = jax.random.uniform(k6, (output_size,), jnp.float32, -kf, kf)
    return dict(layers=layers, W_fc=W_fc, b_fc=b_fc)


def rnn_price_predictor(x, params, num_layers, output_size):
    batch, seq_len, input_size = x.shape
    hidden_size = params["layers"][0]["W_hh"].shape[0]

    # Wrapper-side layout plumbing (free):
    #   * time-major flatten of x -> (T*B, D) so the kernel never reshapes,
    #   * pre-transpose weights so H sits on the lane axis,
    #   * fuse b_ih + b_hh,
    #   * pre-stack [W_ih_l.T; W_hh_l.T] -> (2H, H) for layers >= 1 so each
    #     step is one (B, 2H) @ (2H, H) MXU push.
    x_tm = jnp.transpose(x.astype(jnp.float32), (1, 0, 2)).reshape(
        seq_len * batch, input_size
    )

    l0 = params["layers"][0]
    flat_inputs = [
        x_tm,
        l0["W_ih"].T,                                   # (D, H)
        l0["W_hh"].T,                                   # (H, H)
        (l0["b_ih"] + l0["b_hh"]).reshape(1, -1),       # (1, H)
    ]
    for lp in params["layers"][1:]:
        w_cat = jnp.concatenate([lp["W_ih"].T, lp["W_hh"].T], axis=0)  # (2H, H)
        flat_inputs += [w_cat, (lp["b_ih"] + lp["b_hh"]).reshape(1, -1)]
    flat_inputs += [params["W_fc"].T, params["b_fc"].reshape(1, -1)]

    kernel = make_rnn_kernel(num_layers, seq_len, batch)

    # TODO(synk): at production sizes, add a "parallel" grid over batch tiles
    # (per-tile BlockSpecs for x/out, constant index_map for weights, and
    # vmem_limit_bytes sized for v7x's 64 MiB) to use both v7x TensorCores and
    # bound VMEM; at B=2, T=8, H=32 everything fits trivially on one core.
    return pl.pallas_call(
        kernel,
        out_shape=jax.ShapeDtypeStruct((batch, output_size), jnp.float32),
        in_specs=[pl.BlockSpec(memory_space=pltpu.MemorySpace.VMEM)] * len(flat_inputs),
        out_specs=pl.BlockSpec(memory_space=pltpu.MemorySpace.VMEM),
    )(*flat_inputs)


def reference_forward(x, params):
    """Pure-JAX reference with PyTorch nn.RNN(tanh, batch_first) semantics."""
    layer_in = x.astype(jnp.float32)
    batch = layer_in.shape[0]
    for lp in params["layers"]:
        hidden = lp["W_hh"].shape[0]
        h = jnp.zeros((batch, hidden), jnp.float32)
        outs = []
        for t in range(layer_in.shape[1]):
            h = jnp.tanh(
                layer_in[:, t, :] @ lp["W_ih"].T
                + lp["b_ih"]
                + h @ lp["W_hh"].T
                + lp["b_hh"]
            )
            outs.append(h)
        layer_in = jnp.stack(outs, axis=1)
    return layer_in[:, -1, :] @ params["W_fc"].T + params["b_fc"]


if __name__ == "__main__":
    # Small shapes consistent with the module's forward:
    batch, seq_len = 2, 8
    input_size, hidden_size, num_layers, output_size = 4, 32, 2, 1

    key = jax.random.PRNGKey(0)
    key, xkey = jax.random.split(key)
    x = jax.random.normal(xkey, (batch, seq_len, input_size), jnp.float32)

    params = init_params(key, input_size, hidden_size, num_layers, output_size)

    out = rnn_price_predictor(x, params, num_layers, output_size)
    out = jax.block_until_ready(out)

    ref = jax.block_until_ready(reference_forward(x, params))
    assert out.shape == (batch, output_size)
    assert jnp.allclose(out, ref, atol=1e-5, rtol=1e-5)

    print("KERNEL_OK")
</pallas_src>

<mosaic_0001>
module attributes {stable_mosaic.version = 11 : i64} {
  func.func @kernel(%arg0: memref<16x4xf32, #tpu.memory_space<vmem>>, %arg1: memref<4x32xf32, #tpu.memory_space<vmem>>, %arg2: memref<32x32xf32, #tpu.memory_space<vmem>>, %arg3: memref<1x32xf32, #tpu.memory_space<vmem>>, %arg4: memref<64x32xf32, #tpu.memory_space<vmem>>, %arg5: memref<1x32xf32, #tpu.memory_space<vmem>>, %arg6: memref<32x1xf32, #tpu.memory_space<vmem>>, %arg7: memref<1x1xf32, #tpu.memory_space<vmem>>, %arg8: memref<2x1xf32, #tpu.memory_space<vmem>>) attributes {dimension_semantics = [], scalar_prefetch = 0 : i64, scratch_operands = 0 : i64, tpu.core_type = #tpu.core_type<tc>} {
    %c0 = arith.constant 0 : index
    %c0_0 = arith.constant 0 : index
    %0 = vector.load %arg0[%c0, %c0_0] : memref<16x4xf32, #tpu.memory_space<vmem>>, vector<16x4xf32>
    %c0_1 = arith.constant 0 : index
    %c0_2 = arith.constant 0 : index
    %1 = vector.load %arg1[%c0_1, %c0_2] : memref<4x32xf32, #tpu.memory_space<vmem>>, vector<4x32xf32>
    %cst = arith.constant dense<0.000000e+00> : vector<16x32xf32>
    %2 = tpu.matmul %0, %1, %cst {dimension_numbers = #tpu.dot_dimension_numbers<[1], [0], [0], [1], [0, 0, 1, 1], [], []>} : vector<16x4xf32>, vector<4x32xf32>, vector<16x32xf32> -> vector<16x32xf32>
    %c0_3 = arith.constant 0 : index
    %c0_4 = arith.constant 0 : index
    %3 = vector.load %arg3[%c0_3, %c0_4] : memref<1x32xf32, #tpu.memory_space<vmem>>, vector<1x32xf32>
    %4 = vector.broadcast %3 : vector<1x32xf32> to vector<16x32xf32>
    %5 = arith.addf %2, %4 : vector<16x32xf32>
    %c0_5 = arith.constant 0 : index
    %c0_6 = arith.constant 0 : index
    %6 = vector.load %arg2[%c0_5, %c0_6] : memref<32x32xf32, #tpu.memory_space<vmem>>, vector<32x32xf32>
    %c0_7 = arith.constant 0 : index
    %c0_8 = arith.constant 0 : index
    %7 = vector.load %arg4[%c0_7, %c0_8] : memref<64x32xf32, #tpu.memory_space<vmem>>, vector<64x32xf32>
    %c0_9 = arith.constant 0 : index
    %c0_10 = arith.constant 0 : index
    %8 = vector.load %arg5[%c0_9, %c0_10] : memref<1x32xf32, #tpu.memory_space<vmem>>, vector<1x32xf32>
    %9 = vector.shape_cast %8 : vector<1x32xf32> to vector<1x32xf32>
    %10 = vector.broadcast %9 : vector<1x32xf32> to vector<2x32xf32>
    %cst_11 = arith.constant 0.000000e+00 : f32
    %11 = vector.broadcast %cst_11 : f32 to vector<2x32xf32>
    %cst_12 = arith.constant 0.000000e+00 : f32
    %12 = vector.broadcast %cst_12 : f32 to vector<2x32xf32>
    %13 = vector.extract_strided_slice %5 {offsets = [0, 0], sizes = [2, 32], strides = [1, 1]} : vector<16x32xf32> to vector<2x32xf32>
    %cst_13 = arith.constant dense<0.000000e+00> : vector<2x32xf32>
    %14 = tpu.matmul %11, %6, %cst_13 {dimension_numbers = #tpu.dot_dimension_numbers<[1], [0], [0], [1], [0, 0, 1, 1], [], []>} : vector<2x32xf32>, vector<32x32xf32>, vector<2x32xf32> -> vector<2x32xf32>
    %15 = arith.addf %13, %14 : vector<2x32xf32>
    %16 = math.tanh %15 : vector<2x32xf32>
    %17 = tpu.concatenate %16, %12 in 1 : vector<2x32xf32>, vector<2x32xf32> -> vector<2x64xf32>
    %cst_14 = arith.constant dense<0.000000e+00> : vector<2x32xf32>
    %18 = tpu.matmul %17, %7, %cst_14 {dimension_numbers = #tpu.dot_dimension_numbers<[1], [0], [0], [1], [0, 0, 1, 1], [], []>} : vector<2x64xf32>, vector<64x32xf32>, vector<2x32xf32> -> vector<2x32xf32>
    %19 = arith.addf %18, %10 : vector<2x32xf32>
    %20 = math.tanh %19 : vector<2x32xf32>
    %21 = vector.extract_strided_slice %5 {offsets = [2, 0], sizes = [2, 32], strides = [1, 1]} : vector<16x32xf32> to vector<2x32xf32>
    %cst_15 = arith.constant dense<0.000000e+00> : vector<2x32xf32>
    %22 = tpu.matmul %16, %6, %cst_15 {dimension_numbers = #tpu.dot_dimension_numbers<[1], [0], [0], [1], [0, 0, 1, 1], [], []>} : vector<2x32xf32>, vector<32x32xf32>, vector<2x32xf32> -> vector<2x32xf32>
    %23 = arith.addf %21, %22 : vector<2x32xf32>
    %24 = math.tanh %23 : vector<2x32xf32>
    %25 = tpu.concatenate %24, %20 in 1 : vector<2x32xf32>, vector<2x32xf32> -> vector<2x64xf32>
    %cst_16 = arith.constant dense<0.000000e+00> : vector<2x32xf32>
    %26 = tpu.matmul %25, %7, %cst_16 {dimension_numbers = #tpu.dot_dimension_numbers<[1], [0], [0], [1], [0, 0, 1, 1], [], []>} : vector<2x64xf32>, vector<64x32xf32>, vector<2x32xf32> -> vector<2x32xf32>
    %27 = arith.addf %26, %10 : vector<2x32xf32>
    %28 = math.tanh %27 : vector<2x32xf32>
    %29 = vector.extract_strided_slice %5 {offsets = [4, 0], sizes = [2, 32], strides = [1, 1]} : vector<16x32xf32> to vector<2x32xf32>
    %cst_17 = arith.constant dense<0.000000e+00> : vector<2x32xf32>
    %30 = tpu.matmul %24, %6, %cst_17 {dimension_numbers = #tpu.dot_dimension_numbers<[1], [0], [0], [1], [0, 0, 1, 1], [], []>} : vector<2x32xf32>, vector<32x32xf32>, vector<2x32xf32> -> vector<2x32xf32>
    %31 = arith.addf %29, %30 : vector<2x32xf32>
    %32 = math.tanh %31 : vector<2x32xf32>
    %33 = tpu.concatenate %32, %28 in 1 : vector<2x32xf32>, vector<2x32xf32> -> vector<2x64xf32>
    %cst_18 = arith.constant dense<0.000000e+00> : vector<2x32xf32>
    %34 = tpu.matmul %33, %7, %cst_18 {dimension_numbers = #tpu.dot_dimension_numbers<[1], [0], [0], [1], [0, 0, 1, 1], [], []>} : vector<2x64xf32>, vector<64x32xf32>, vector<2x32xf32> -> vector<2x32xf32>
    %35 = arith.addf %34, %10 : vector<2x32xf32>
    %36 = math.tanh %35 : vector<2x32xf32>
    %37 = vector.extract_strided_slice %5 {offsets = [6, 0], sizes = [2, 32], strides = [1, 1]} : vector<16x32xf32> to vector<2x32xf32>
    %cst_19 = arith.constant dense<0.000000e+00> : vector<2x32xf32>
    %38 = tpu.matmul %32, %6, %cst_19 {dimension_numbers = #tpu.dot_dimension_numbers<[1], [0], [0], [1], [0, 0, 1, 1], [], []>} : vector<2x32xf32>, vector<32x32xf32>, vector<2x32xf32> -> vector<2x32xf32>
    %39 = arith.addf %37, %38 : vector<2x32xf32>
    %40 = math.tanh %39 : vector<2x32xf32>
    %41 = tpu.concatenate %40, %36 in 1 : vector<2x32xf32>, vector<2x32xf32> -> vector<2x64xf32>
    %cst_20 = arith.constant dense<0.000000e+00> : vector<2x32xf32>
    %42 = tpu.matmul %41, %7, %cst_20 {dimension_numbers = #tpu.dot_dimension_numbers<[1], [0], [0], [1], [0, 0, 1, 1], [], []>} : vector<2x64xf32>, vector<64x32xf32>, vector<2x32xf32> -> vector<2x32xf32>
    %43 = arith.addf %42, %10 : vector<2x32xf32>
    %44 = math.tanh %43 : vector<2x32xf32>
    %45 = vector.extract_strided_slice %5 {offsets = [8, 0], sizes = [2, 32], strides = [1, 1]} : vector<16x32xf32> to vector<2x32xf32>
    %cst_21 = arith.constant dense<0.000000e+00> : vector<2x32xf32>
    %46 = tpu.matmul %40, %6, %cst_21 {dimension_numbers = #tpu.dot_dimension_numbers<[1], [0], [0], [1], [0, 0, 1, 1], [], []>} : vector<2x32xf32>, vector<32x32xf32>, vector<2x32xf32> -> vector<2x32xf32>
    %47 = arith.addf %45, %46 : vector<2x32xf32>
    %48 = math.tanh %47 : vector<2x32xf32>
    %49 = tpu.concatenate %48, %44 in 1 : vector<2x32xf32>, vector<2x32xf32> -> vector<2x64xf32>
    %cst_22 = arith.constant dense<0.000000e+00> : vector<2x32xf32>
    %50 = tpu.matmul %49, %7, %cst_22 {dimension_numbers = #tpu.dot_dimension_numbers<[1], [0], [0], [1], [0, 0, 1, 1], [], []>} : vector<2x64xf32>, vector<64x32xf32>, vector<2x32xf32> -> vector<2x32xf32>
    %51 = arith.addf %50, %10 : vector<2x32xf32>
    %52 = math.tanh %51 : vector<2x32xf32>
    %53 = vector.extract_strided_slice %5 {offsets = [10, 0], sizes = [2, 32], strides = [1, 1]} : vector<16x32xf32> to vector<2x32xf32>
    %cst_23 = arith.constant dense<0.000000e+00> : vector<2x32xf32>
    %54 = tpu.matmul %48, %6, %cst_23 {dimension_numbers = #tpu.dot_dimension_numbers<[1], [0], [0], [1], [0, 0, 1, 1], [], []>} : vector<2x32xf32>, vector<32x32xf32>, vector<2x32xf32> -> vector<2x32xf32>
    %55 = arith.addf %53, %54 : vector<2x32xf32>
    %56 = math.tanh %55 : vector<2x32xf32>
    %57 = tpu.concatenate %56, %52 in 1 : vector<2x32xf32>, vector<2x32xf32> -> vector<2x64xf32>
    %cst_24 = arith.constant dense<0.000000e+00> : vector<2x32xf32>
    %58 = tpu.matmul %57, %7, %cst_24 {dimension_numbers = #tpu.dot_dimension_numbers<[1], [0], [0], [1], [0, 0, 1, 1], [], []>} : vector<2x64xf32>, vector<64x32xf32>, vector<2x32xf32> -> vector<2x32xf32>
    %59 = arith.addf %58, %10 : vector<2x32xf32>
    %60 = math.tanh %59 : vector<2x32xf32>
    %61 = vector.extract_strided_slice %5 {offsets = [12, 0], sizes = [2, 32], strides = [1, 1]} : vector<16x32xf32> to vector<2x32xf32>
    %cst_25 = arith.constant dense<0.000000e+00> : vector<2x32xf32>
    %62 = tpu.matmul %56, %6, %cst_25 {dimension_numbers = #tpu.dot_dimension_numbers<[1], [0], [0], [1], [0, 0, 1, 1], [], []>} : vector<2x32xf32>, vector<32x32xf32>, vector<2x32xf32> -> vector<2x32xf32>
    %63 = arith.addf %61, %62 : vector<2x32xf32>
    %64 = math.tanh %63 : vector<2x32xf32>
    %65 = tpu.concatenate %64, %60 in 1 : vector<2x32xf32>, vector<2x32xf32> -> vector<2x64xf32>
    %cst_26 = arith.constant dense<0.000000e+00> : vector<2x32xf32>
    %66 = tpu.matmul %65, %7, %cst_26 {dimension_numbers = #tpu.dot_dimension_numbers<[1], [0], [0], [1], [0, 0, 1, 1], [], []>} : vector<2x64xf32>, vector<64x32xf32>, vector<2x32xf32> -> vector<2x32xf32>
    %67 = arith.addf %66, %10 : vector<2x32xf32>
    %68 = math.tanh %67 : vector<2x32xf32>
    %69 = vector.extract_strided_slice %5 {offsets = [14, 0], sizes = [2, 32], strides = [1, 1]} : vector<16x32xf32> to vector<2x32xf32>
    %cst_27 = arith.constant dense<0.000000e+00> : vector<2x32xf32>
    %70 = tpu.matmul %64, %6, %cst_27 {dimension_numbers = #tpu.dot_dimension_numbers<[1], [0], [0], [1], [0, 0, 1, 1], [], []>} : vector<2x32xf32>, vector<32x32xf32>, vector<2x32xf32> -> vector<2x32xf32>
    %71 = arith.addf %69, %70 : vector<2x32xf32>
    %72 = math.tanh %71 : vector<2x32xf32>
    %73 = tpu.concatenate %72, %68 in 1 : vector<2x32xf32>, vector<2x32xf32> -> vector<2x64xf32>
    %cst_28 = arith.constant dense<0.000000e+00> : vector<2x32xf32>
    %74 = tpu.matmul %73, %7, %cst_28 {dimension_numbers = #tpu.dot_dimension_numbers<[1], [0], [0], [1], [0, 0, 1, 1], [], []>} : vector<2x64xf32>, vector<64x32xf32>, vector<2x32xf32> -> vector<2x32xf32>
    %75 = arith.addf %74, %10 : vector<2x32xf32>
    %76 = math.tanh %75 : vector<2x32xf32>
    %c0_29 = arith.constant 0 : index
    %c0_30 = arith.constant 0 : index
    %77 = vector.load %arg6[%c0_29, %c0_30] : memref<32x1xf32, #tpu.memory_space<vmem>>, vector<32x1xf32>
    %cst_31 = arith.constant dense<0.000000e+00> : vector<2x1xf32>
    %78 = tpu.matmul %76, %77, %cst_31 {dimension_numbers = #tpu.dot_dimension_numbers<[1], [0], [0], [1], [0, 0, 1, 1], [], []>} : vector<2x32xf32>, vector<32x1xf32>, vector<2x1xf32> -> vector<2x1xf32>
    %c0_32 = arith.constant 0 : index
    %c0_33 = arith.constant 0 : index
    %79 = vector.load %arg7[%c0_32, %c0_33] : memref<1x1xf32, #tpu.memory_space<vmem>>, vector<1x1xf32>
    %80 = vector.broadcast %79 : vector<1x1xf32> to vector<2x1xf32>
    %81 = arith.addf %78, %80 : vector<2x1xf32>
    %c0_34 = arith.constant 0 : index
    %c0_35 = arith.constant 0 : index
    %82 = vector.load %arg8[%c0_34, %c0_35] : memref<2x1xf32, #tpu.memory_space<vmem>>, vector<2x1xf32>
    tpu.vector_store %arg8[%c0_34, %c0_35], %81 {strides = array<i32>} : memref<2x1xf32, #tpu.memory_space<vmem>>, vector<2x1xf32>,
    return
  }
}

</mosaic_0001>

<llo_original>
// kernel: tpu_custom_call.1
$region0: #{tpu_custom_call.1}
  #allocation0 [shape = 'u32[]', space=smem, size = 0x4, offset = 0x4, fixed_abs, tag = 'smem constant byte address 0x4 - core index']
  #allocation1 [shape = 'u32[144,128]{1,0:T(1,128)}', space=vmem, size = 0x12000, scoped, tag = 'internal scratch']
  #allocation2 [shape = 'f32[1,1]{1,0:T(1,128)S(1)}', space=vmem, size = 0x200, scoped, tag = 'scoped memory for tpu_custom_call.1']
  %s0 = inlined_call_operand.vmem [shape: f32[16,4], index: 0, kind: input, shape index: {}]
  %s1 = inlined_call_operand.vmem [shape: f32[4,32], index: 1, kind: input, shape index: {}]
  %s2 = inlined_call_operand.vmem [shape: f32[32,32], index: 2, kind: input, shape index: {}]
  %s3 = inlined_call_operand.vmem [shape: f32[1,32], index: 3, kind: input, shape index: {}]
  %s4 = inlined_call_operand.vmem [shape: f32[64,32], index: 4, kind: input, shape index: {}]
  %s5 = inlined_call_operand.vmem [shape: f32[1,32], index: 5, kind: input, shape index: {}]
  %s6 = inlined_call_operand.vmem [shape: f32[32,1], index: 6, kind: input, shape index: {}]
  %s7 = inlined_call_operand.<no memory space> [shape: f32[1,1], index: 7, kind: input, shape index: {}]
  %s8 = inlined_call_operand.vmem [shape: f32[2,1], index: 8, kind: output, shape index: {}]
  %s9 = sld [smem:[#allocation0]]
  $region42: #{tpu_custom_call.1} parent=0
    _
  %s11 = ssub.s32 1, %s9
  %s12 = scalar_select 0, %s11, %s9
  %v13 = vstv %s7
  %14 = vst [vmem:[#allocation2] sm:$0x1] %v13
  // Predicated region
  $region2: #{tpu_custom_call.1} parent=0 // pred_check
    _
  $region3: #{tpu_custom_call.1} parent=0 // pred_check_branch
    %16 = sbr.rel (0) target = $region5
  $region4: #{tpu_custom_call.1} parent=0 // pred_region
    _
  $region5: #{tpu_custom_call.1} parent=0 // pred_fallthru
    _
  // Predicated region
  $region6: #{tpu_custom_call.1} parent=0 // pred_check
    _
  $region7: #{tpu_custom_call.1} parent=0 // pred_check_branch
    %18 = sbr.rel (0) target = $region9
  $region8: #{tpu_custom_call.1} parent=0 // pred_region
    _
  $region9: #{tpu_custom_call.1} parent=0 // pred_fallthru
    _
  // Predicated region
  $region10: #{tpu_custom_call.1} parent=0 // pred_check
    _
  $region11: #{tpu_custom_call.1} parent=0 // pred_check_branch
    %20 = sbr.rel (0) target = $region13
  $region12: #{tpu_custom_call.1} parent=0 // pred_region
    _
  $region13: #{tpu_custom_call.1} parent=0 // pred_fallthru
    _
  // Predicated region
  $region14: #{tpu_custom_call.1} parent=0 // pred_check
    _
  $region15: #{tpu_custom_call.1} parent=0 // pred_check_branch
    %22 = sbr.rel (0) target = $region17
  $region16: #{tpu_custom_call.1} parent=0 // pred_region
    _
  $region17: #{tpu_custom_call.1} parent=0 // pred_fallthru
    _
  // Predicated region
  $region18: #{tpu_custom_call.1} parent=0 // pred_check
    _
  $region19: #{tpu_custom_call.1} parent=0 // pred_check_branch
    %24 = sbr.rel (0) target = $region21
  $region20: #{tpu_custom_call.1} parent=0 // pred_region
    _
  $region21: #{tpu_custom_call.1} parent=0 // pred_fallthru
    _
  // Predicated region
  $region22: #{tpu_custom_call.1} parent=0 // pred_check
    _
  $region23: #{tpu_custom_call.1} parent=0 // pred_check_branch
    %26 = sbr.rel (0) target = $region25
  $region24: #{tpu_custom_call.1} parent=0 // pred_region
    _
  $region25: #{tpu_custom_call.1} parent=0 // pred_fallthru
    _
  // Predicated region
  $region26: #{tpu_custom_call.1} parent=0 // pred_check
    _
  $region27: #{tpu_custom_call.1} parent=0 // pred_check_branch
    %28 = sbr.rel (0) target = $region29
  $region28: #{tpu_custom_call.1} parent=0 // pred_region
    _
  $region29: #{tpu_custom_call.1} parent=0 // pred_fallthru
    _
  // Predicated region
  $region30: #{tpu_custom_call.1} parent=0 // pred_check
    _
  $region31: #{tpu_custom_call.1} parent=0 // pred_check_branch
    %30 = sbr.rel (0) target = $region33
  $region32: #{tpu_custom_call.1} parent=0 // pred_region
    _
  $region33: #{tpu_custom_call.1} parent=0 // pred_fallthru
    _
  %v31 = vld [vmem:[%s0] sm:$0xff]
  %v32 = vld [vmem:[%s0 + $0x8] sm:$0xff]
  %v33 = vld [vmem:[%s1] sm:$0xf]
  %v34 = vld [vmem:[%s3] sm:$0x1]
  %v36 = vlaneseq
  %v37 = vshrl.u32 %v36, 7
  %v38 = vsub.s32 0, %v37
  %v39 = vrot.slane %v34, %v38
  %vm41 = vcmask 31744
  %v43 = vsel %vm41, %v31, 0
  %v46 = vsel %vm41, %v32, 0
  %vm48 = vcmask 1043456
  %v50 = vsel %vm48, %v33, 0
  %52 = vmatprep.subr.mxu0 0.0
  %53 = vmatpush1.msra.mxu0 0.0
  %54 = vmatprep.subr.mxu0 0.0
  %55 = vmatpush1.msra.mxu0 0.0
  %56 = vmatprep.subr.mxu0 0.0
  %57 = vmatpush1.msra.mxu0 0.0
  %58 = vmatprep.subr.mxu0 0.0
  %59 = vmatpush1.msra.mxu0 0.0
  %60 = vmatprep.subr.mxu0 0.0
  %61 = vmatpush1.msra.mxu0 0.0
  %62 = vmatprep.subr.mxu0 0.0
  %63 = vmatpush1.msra.mxu0 0.0
  %64 = vmatprep.subr.mxu0 0.0
  %65 = vmatpush1.msra.mxu0 0.0
  %66 = vmatprep.subr.mxu0 0.0
  %67 = vmatpush1.msra.mxu0 0.0
  %68 = vmatprep.subr.mxu0 0.0
  %69 = vmatpush1.msra.mxu0 0.0
  %70 = vmatprep.subr.mxu0 0.0
  %71 = vmatpush1.msra.mxu0 0.0
  %72 = vmatprep.subr.mxu0 0.0
  %73 = vmatpush1.msra.mxu0 0.0
  %74 = vmatprep.subr.mxu0 0.0
  %75 = vmatpush1.msra.mxu0 0.0
  %76 = vmatprep.subr.mxu0 0.0
  %77 = vmatpush1.msra.mxu0 0.0
  %78 = vmatprep.subr.mxu0 0.0
  %79 = vmatpush1.msra.mxu0 0.0
  %80 = vmatprep.subr.mxu0 0.0
  %81 = vmatpush1.msra.mxu0 0.0
  %82 = vmatprep.subr.mxu0 0.0
  %83 = vmatpush1.msra.mxu0 %v50
  %84 = vmatprep.subr.mxu0 0.0
  %85 = vmatpush2.msra.mxu0 0.0
  %86 = vmatprep.subr.mxu0 0.0
  %87 = vmatpush2.msra.mxu0 0.0
  %88 = vmatprep.subr.mxu0 0.0
  %89 = vmatpush2.msra.mxu0 0.0
  %90 = vmatprep.subr.mxu0 0.0
  %91 = vmatpush2.msra.mxu0 0.0
  %92 = vmatprep.subr.mxu0 0.0
  %93 = vmatpush2.msra.mxu0 0.0
  %94 = vmatprep.subr.mxu0 0.0
  %95 = vmatpush2.msra.mxu0 0.0
  %96 = vmatprep.subr.mxu0 0.0
  %97 = vmatpush2.msra.mxu0 0.0
  %98 = vmatprep.subr.mxu0 0.0
  %99 = vmatpush2.msra.mxu0 0.0
  %100 = vmatprep.subr.mxu0 0.0
  %101 = vmatpush2.msra.mxu0 0.0
  %102 = vmatprep.subr.mxu0 0.0
  %103 = vmatpush2.msra.mxu0 0.0
  %104 = vmatprep.subr.mxu0 0.0
  %105 = vmatpush2.msra.mxu0 0.0
  %106 = vmatprep.subr.mxu0 0.0
  %107 = vmatpush2.msra.mxu0 0.0
  %108 = vmatprep.subr.mxu0 0.0
  %109 = vmatpush2.msra.mxu0 0.0
  %110 = vmatprep.subr.mxu0 0.0
  %111 = vmatpush2.msra.mxu0 0.0
  %112 = vmatprep.subr.mxu0 0.0
  %113 = vmatpush2.msra.mxu0 0.0
  %114 = vmatprep.subr.mxu0 0.0
  %115 = vmatpush2.msra.mxu0 0.0
  %116 = vmatprep.mubr.f32.mxu0 0.0
  %117 = vmatmul.mubr.f32.gmra.mxu0 %v43
  %v118 = vpop.f32.mrf.mxu0
  %v119 = vadd.f32 %v39, %v118
  %v120 = vpop.f32.mrf.mxu0
  %121 = vmatprep.mubr.f32.mxu0 0.0
  %122 = vmatmul.mubr.f32.gmra.mxu0 %v46
  %v123 = vpop.f32.mrf.mxu0
  %v124 = vadd.f32 %v39, %v123
  %v125 = vpop.f32.mrf.mxu0
  %126 = vdwg.mxu0
  %v127 = vld [vmem:[%s2] sm:$0xff]
  %v128 = vld [vmem:[%s2 + $0x8] sm:$0xff]
  %v129 = vld [vmem:[%s2 + $0x10] sm:$0xff]
  %v130 = vld [vmem:[%s2 + $0x18] sm:$0xff]
  %v131 = vld [vmem:[%s4] sm:$0xff]
  %v132 = vld [vmem:[%s4 + $0x8] sm:$0xff]
  %v133 = vld [vmem:[%s4 + $0x10] sm:$0xff]
  %v134 = vld [vmem:[%s4 + $0x18] sm:$0xff]
  %v135 = vld [vmem:[%s4 + $0x20] sm:$0xff]
  %v136 = vld [vmem:[%s4 + $0x28] sm:$0xff]
  %v137 = vld [vmem:[%s4 + $0x30] sm:$0xff]
  %v138 = vld [vmem:[%s4 + $0x38] sm:$0xff]
  %v139 = vld [vmem:[%s5] sm:$0x1]
  %v141 = vlaneseq
  %v142 = vshrl.u32 %v141, 7
  %v143 = vsub.s32 0, %v142
  %v144 = vrot.slane %v139, %v143
  %vm146 = vcmask 261120
  %v148 = vsel %vm146, 0.0, 0
  %150 = vmatprep.subr.mxu0 0.0
  %151 = vmatpush1.msra.mxu0 0.0
  %152 = vmatprep.subr.mxu0 0.0
  %153 = vmatpush1.msra.mxu0 0.0
  %154 = vmatprep.subr.mxu0 0.0
  %155 = vmatpush1.msra.mxu0 0.0
  %156 = vmatprep.subr.mxu0 0.0
  %157 = vmatpush1.msra.mxu0 0.0
  %158 = vmatprep.subr.mxu0 0.0
  %159 = vmatpush1.msra.mxu0 0.0
  %160 = vmatprep.subr.mxu0 0.0
  %161 = vmatpush1.msra.mxu0 0.0
  %162 = vmatprep.subr.mxu0 0.0
  %163 = vmatpush1.msra.mxu0 0.0
  %164 = vmatprep.subr.mxu0 0.0
  %165 = vmatpush1.msra.mxu0 0.0
  %166 = vmatprep.subr.mxu0 0.0
  %167 = vmatpush1.msra.mxu0 0.0
  %168 = vmatprep.subr.mxu0 0.0
  %169 = vmatpush1.msra.mxu0 0.0
  %170 = vmatprep.subr.mxu0 0.0
  %171 = vmatpush1.msra.mxu0 0.0
  %172 = vmatprep.subr.mxu0 0.0
  %173 = vmatpush1.msra.mxu0 0.0
  %174 = vmatprep.subr.mxu0 0.0
  %175 = vmatpush1.msra.mxu0 %v130
  %176 = vmatprep.subr.mxu0 0.0
  %177 = vmatpush1.msra.mxu0 %v129
  %178 = vmatprep.subr.mxu0 0.0
  %179 = vmatpush1.msra.mxu0 %v128
  %180 = vmatprep.subr.mxu0 0.0
  %181 = vmatpush1.msra.mxu0 %v127
  %182 = vmatprep.subr.mxu0 0.0
  %183 = vmatpush2.msra.mxu0 0.0
  %184 = vmatprep.subr.mxu0 0.0
  %185 = vmatpush2.msra.mxu0 0.0
  %186 = vmatprep.subr.mxu0 0.0
  %187 = vmatpush2.msra.mxu0 0.0
  %188 = vmatprep.subr.mxu0 0.0
  %189 = vmatpush2.msra.mxu0 0.0
  %190 = vmatprep.subr.mxu0 0.0
  %191 = vmatpush2.msra.mxu0 0.0
  %192 = vmatprep.subr.mxu0 0.0
  %193 = vmatpush2.msra.mxu0 0.0
  %194 = vmatprep.subr.mxu0 0.0
  %195 = vmatpush2.msra.mxu0 0.0
  %196 = vmatprep.subr.mxu0 0.0
  %197 = vmatpush2.msra.mxu0 0.0
  %198 = vmatprep.subr.mxu0 0.0
  %199 = vmatpush2.msra.mxu0 0.0
  %200 = vmatprep.subr.mxu0 0.0
  %201 = vmatpush2.msra.mxu0 0.0
  %202 = vmatprep.subr.mxu0 0.0
  %203 = vmatpush2.msra.mxu0 0.0
  %204 = vmatprep.subr.mxu0 0.0
  %205 = vmatpush2.msra.mxu0 0.0
  %206 = vmatprep.subr.mxu0 0.0
  %207 = vmatpush2.msra.mxu0 0.0
  %208 = vmatprep.subr.mxu0 0.0
  %209 = vmatpush2.msra.mxu0 0.0
  %210 = vmatprep.subr.mxu0 0.0
  %211 = vmatpush2.msra.mxu0 0.0
  %212 = vmatprep.subr.mxu0 0.0
  %213 = vmatpush2.msra.mxu0 0.0
  %214 = vmatprep.mubr.f32.mxu0 0.0
  %215 = vmatmul.mubr.f32.gmra.mxu0 %v148
  %v216 = vpop.f32.mrf.mxu0
  %v217 = vadd.f32 0.0, %v216
  %v218 = vpop.f32.mrf.mxu0
  %219 = vdwg.mxu0
  %v220 = vadd.f32 %v119, %v217
  %v221 = vtanh.pop %v220
  %v222 = vsel %vm146, %v221, 0.0
  %vm223 = vcmask 523264
  %v225 = vsel %vm223, %v222, 0
  %227 = vmatprep.subr.mxu0 0.0
  %228 = vmatpush1.msra.mxu0 0.0
  %229 = vmatprep.subr.mxu0 0.0
  %230 = vmatpush1.msra.mxu0 0.0
  %231 = vmatprep.subr.mxu0 0.0
  %232 = vmatpush1.msra.mxu0 0.0
  %233 = vmatprep.subr.mxu0 0.0
  %234 = vmatpush1.msra.mxu0 0.0
  %235 = vmatprep.subr.mxu0 0.0
  %236 = vmatpush1.msra.mxu0 0.0
  %237 = vmatprep.subr.mxu0 0.0
  %238 = vmatpush1.msra.mxu0 0.0
  %239 = vmatprep.subr.mxu0 0.0
  %240 = vmatpush1.msra.mxu0 0.0
  %241 = vmatprep.subr.mxu0 0.0
  %242 = vmatpush1.msra.mxu0 0.0
  %243 = vmatprep.subr.mxu0 0.0
  %244 = vmatpush1.msra.mxu0 %v138
  %245 = vmatprep.subr.mxu0 0.0
  %246 = vmatpush1.msra.mxu0 %v137
  %247 = vmatprep.subr.mxu0 0.0
  %248 = vmatpush1.msra.mxu0 %v136
  %249 = vmatprep.subr.mxu0 0.0
  %250 = vmatpush1.msra.mxu0 %v135
  %251 = vmatprep.subr.mxu0 0.0
  %252 = vmatpush1.msra.mxu0 %v134
  %253 = vmatprep.subr.mxu0 0.0
  %254 = vmatpush1.msra.mxu0 %v133
  %255 = vmatprep.subr.mxu0 0.0
  %256 = vmatpush1.msra.mxu0 %v132
  %257 = vmatprep.subr.mxu0 0.0
  %258 = vmatpush1.msra.mxu0 %v131
  %259 = vmatprep.subr.mxu0 0.0
  %260 = vmatpush2.msra.mxu0 0.0
  %261 = vmatprep.subr.mxu0 0.0
  %262 = vmatpush2.msra.mxu0 0.0
  %263 = vmatprep.subr.mxu0 0.0
  %264 = vmatpush2.msra.mxu0 0.0
  %265 = vmatprep.subr.mxu0 0.0
  %266 = vmatpush2.msra.mxu0 0.0
  %267 = vmatprep.subr.mxu0 0.0
  %268 = vmatpush2.msra.mxu0 0.0
  %269 = vmatprep.subr.mxu0 0.0
  %270 = vmatpush2.msra.mxu0 0.0
  %271 = vmatprep.subr.mxu0 0.0
  %272 = vmatpush2.msra.mxu0 0.0
  %273 = vmatprep.subr.mxu0 0.0
  %274 = vmatpush2.msra.mxu0 0.0
  %275 = vmatprep.subr.mxu0 0.0
  %276 = vmatpush2.msra.mxu0 0.0
  %277 = vmatprep.subr.mxu0 0.0
  %278 = vmatpush2.msra.mxu0 0.0
  %279 = vmatprep.subr.mxu0 0.0
  %280 = vmatpush2.msra.mxu0 0.0
  %281 = vmatprep.subr.mxu0 0.0
  %282 = vmatpush2.msra.mxu0 0.0
  %283 = vmatprep.subr.mxu0 0.0
  %284 = vmatpush2.msra.mxu0 0.0
  %285 = vmatprep.subr.mxu0 0.0
  %286 = vmatpush2.msra.mxu0 0.0
  %287 = vmatprep.subr.mxu0 0.0
  %288 = vmatpush2.msra.mxu0 0.0
  %289 = vmatprep.subr.mxu0 0.0
  %290 = vmatpush2.msra.mxu0 0.0
  %291 = vmatprep.mubr.f32.mxu0 0.0
  %292 = vmatmul.mubr.f32.gmra.mxu0 %v225
  %v293 = vpop.f32.mrf.mxu0
  %v294 = vadd.f32 %v144, %v293
  %v295 = vpop.f32.mrf.mxu0
  %296 = vdwg.mxu0
  %v297 = vtanh.pop %v294
  %v299 = vsel %vm146, %v221, 0
  %301 = vmatprep.subr.mxu0 0.0
  %302 = vmatpush1.msra.mxu0 0.0
  %303 = vmatprep.subr.mxu0 0.0
  %304 = vmatpush1.msra.mxu0 0.0
  %305 = vmatprep.subr.mxu0 0.0
  %306 = vmatpush1.msra.mxu0 0.0
  %307 = vmatprep.subr.mxu0 0.0
  %308 = vmatpush1.msra.mxu0 0.0
  %309 = vmatprep.subr.mxu0 0.0
  %310 = vmatpush1.msra.mxu0 0.0
  %311 = vmatprep.subr.mxu0 0.0
  %312 = vmatpush1.msra.mxu0 0.0
  %313 = vmatprep.subr.mxu0 0.0
  %314 = vmatpush1.msra.mxu0 0.0
  %315 = vmatprep.subr.mxu0 0.0
  %316 = vmatpush1.msra.mxu0 0.0
  %317 = vmatprep.subr.mxu0 0.0
  %318 = vmatpush1.msra.mxu0 0.0
  %319 = vmatprep.subr.mxu0 0.0
  %320 = vmatpush1.msra.mxu0 0.0
  %321 = vmatprep.subr.mxu0 0.0
  %322 = vmatpush1.msra.mxu0 0.0
  %323 = vmatprep.subr.mxu0 0.0
  %324 = vmatpush1.msra.mxu0 0.0
  %325 = vmatprep.subr.mxu0 0.0
  %326 = vmatpush1.msra.mxu0 %v130
  %327 = vmatprep.subr.mxu0 0.0
  %328 = vmatpush1.msra.mxu0 %v129
  %329 = vmatprep.subr.mxu0 0.0
  %330 = vmatpush1.msra.mxu0 %v128
  %331 = vmatprep.subr.mxu0 0.0
  %332 = vmatpush1.msra.mxu0 %v127
  %333 = vmatprep.subr.mxu0 0.0
  %334 = vmatpush2.msra.mxu0 0.0
  %335 = vmatprep.subr.mxu0 0.0
  %336 = vmatpush2.msra.mxu0 0.0
  %337 = vmatprep.subr.mxu0 0.0
  %338 = vmatpush2.msra.mxu0 0.0
  %339 = vmatprep.subr.mxu0 0.0
  %340 = vmatpush2.msra.mxu0 0.0
  %341 = vmatprep.subr.mxu0 0.0
  %342 = vmatpush2.msra.mxu0 0.0
  %343 = vmatprep.subr.mxu0 0.0
  %344 = vmatpush2.msra.mxu0 0.0
  %345 = vmatprep.subr.mxu0 0.0
  %346 = vmatpush2.msra.mxu0 0.0
  %347 = vmatprep.subr.mxu0 0.0
  %348 = vmatpush2.msra.mxu0 0.0
  %349 = vmatprep.subr.mxu0 0.0
  %350 = vmatpush2.msra.mxu0 0.0
  %351 = vmatprep.subr.mxu0 0.0
  %352 = vmatpush2.msra.mxu0 0.0
  %353 = vmatprep.subr.mxu0 0.0
  %354 = vmatpush2.msra.mxu0 0.0
  %355 = vmatprep.subr.mxu0 0.0
  %356 = vmatpush2.msra.mxu0 0.0
  %357 = vmatprep.subr.mxu0 0.0
  %358 = vmatpush2.msra.mxu0 0.0
  %359 = vmatprep.subr.mxu0 0.0
  %360 = vmatpush2.msra.mxu0 0.0
  %361 = vmatprep.subr.mxu0 0.0
  %362 = vmatpush2.msra.mxu0 0.0
  %363 = vmatprep.subr.mxu0 0.0
  %364 = vmatpush2.msra.mxu0 0.0
  %365 = vmatprep.mubr.f32.mxu0 0.0
  %366 = vmatmul.mubr.f32.gmra.mxu0 %v299
  %v367 = vpop.f32.mrf.mxu0
  %v368 = vadd.f32 0.0, %v367
  %v369 = vpop.f32.mrf.mxu0
  %370 = vdwg.mxu0
  %v372 = vrot.slane %v368, 6
  %v374 = vadd.f32 %v119, %v372
  %v375 = vtanh.pop %v374
  %v377 = vrot.slane %v297, 6
  %378 = vrot.lane.b32.xlu0 %v377, 32
  %v379 = vpop.permute.xlu0 %378
  %v381 = vsel %vm146, %v375, %v379
  %v383 = vrot.slane %v381, 2
  %v384 = vsel %vm223, %v383, 0
  %386 = vmatprep.subr.mxu0 0.0
  %387 = vmatpush1.msra.mxu0 0.0
  %388 = vmatprep.subr.mxu0 0.0
  %389 = vmatpush1.msra.mxu0 0.0
  %390 = vmatprep.subr.mxu0 0.0
  %391 = vmatpush1.msra.mxu0 0.0
  %392 = vmatprep.subr.mxu0 0.0
  %393 = vmatpush1.msra.mxu0 0.0
  %394 = vmatprep.subr.mxu0 0.0
  %395 = vmatpush1.msra.mxu0 0.0
  %396 = vmatprep.subr.mxu0 0.0
  %397 = vmatpush1.msra.mxu0 0.0
  %398 = vmatprep.subr.mxu0 0.0
  %399 = vmatpush1.msra.mxu0 0.0
  %400 = vmatprep.subr.mxu0 0.0
  %401 = vmatpush1.msra.mxu0 0.0
  %402 = vmatprep.subr.mxu0 0.0
  %403 = vmatpush1.msra.mxu0 %v138
  %404 = vmatprep.subr.mxu0 0.0
  %405 = vmatpush1.msra.mxu0 %v137
  %406 = vmatprep.subr.mxu0 0.0
  %407 = vmatpush1.msra.mxu0 %v136
  %408 = vmatprep.subr.mxu0 0.0
  %409 = vmatpush1.msra.mxu0 %v135
  %410 = vmatprep.subr.mxu0 0.0
  %411 = vmatpush1.msra.mxu0 %v134
  %412 = vmatprep.subr.mxu0 0.0
  %413 = vmatpush1.msra.mxu0 %v133
  %414 = vmatprep.subr.mxu0 0.0
  %415 = vmatpush1.msra.mxu0 %v132
  %416 = vmatprep.subr.mxu0 0.0
  %417 = vmatpush1.msra.mxu0 %v131
  %418 = vmatprep.subr.mxu0 0.0
  %419 = vmatpush2.msra.mxu0 0.0
  %420 = vmatprep.subr.mxu0 0.0
  %421 = vmatpush2.msra.mxu0 0.0
  %422 = vmatprep.subr.mxu0 0.0
  %423 = vmatpush2.msra.mxu0 0.0
  %424 = vmatprep.subr.mxu0 0.0
  %425 = vmatpush2.msra.mxu0 0.0
  %426 = vmatprep.subr.mxu0 0.0
  %427 = vmatpush2.msra.mxu0 0.0
  %428 = vmatprep.subr.mxu0 0.0
  %429 = vmatpush2.msra.mxu0 0.0
  %430 = vmatprep.subr.mxu0 0.0
  %431 = vmatpush2.msra.mxu0 0.0
  %432 = vmatprep.subr.mxu0 0.0
  %433 = vmatpush2.msra.mxu0 0.0
  %434 = vmatprep.subr.mxu0 0.0
  %435 = vmatpush2.msra.mxu0 0.0
  %436 = vmatprep.subr.mxu0 0.0
  %437 = vmatpush2.msra.mxu0 0.0
  %438 = vmatprep.subr.mxu0 0.0
  %439 = vmatpush2.msra.mxu0 0.0
  %440 = vmatprep.subr.mxu0 0.0
  %441 = vmatpush2.msra.mxu0 0.0
  %442 = vmatprep.subr.mxu0 0.0
  %443 = vmatpush2.msra.mxu0 0.0
  %444 = vmatprep.subr.mxu0 0.0
  %445 = vmatpush2.msra.mxu0 0.0
  %446 = vmatprep.subr.mxu0 0.0
  %447 = vmatpush2.msra.mxu0 0.0
  %448 = vmatprep.subr.mxu0 0.0
  %449 = vmatpush2.msra.mxu0 0.0
  %450 = vmatprep.mubr.f32.mxu0 0.0
  %451 = vmatmul.mubr.f32.gmra.mxu0 %v384
  %v452 = vpop.f32.mrf.mxu0
  %v453 = vadd.f32 %v144, %v452
  %v454 = vpop.f32.mrf.mxu0
  %455 = vdwg.mxu0
  %v456 = vtanh.pop %v453
  %v458 = vrot.slane %v375, 2
  %v459 = vsel %vm146, %v458, 0
  %461 = vmatprep.subr.mxu0 0.0
  %462 = vmatpush1.msra.mxu0 0.0
  %463 = vmatprep.subr.mxu0 0.0
  %464 = vmatpush1.msra.mxu0 0.0
  %465 = vmatprep.subr.mxu0 0.0
  %466 = vmatpush1.msra.mxu0 0.0
  %467 = vmatprep.subr.mxu0 0.0
  %468 = vmatpush1.msra.mxu0 0.0
  %469 = vmatprep.subr.mxu0 0.0
  %470 = vmatpush1.msra.mxu0 0.0
  %471 = vmatprep.subr.mxu0 0.0
  %472 = vmatpush1.msra.mxu0 0.0
  %473 = vmatprep.subr.mxu0 0.0
  %474 = vmatpush1.msra.mxu0 0.0
  %475 = vmatprep.subr.mxu0 0.0
  %476 = vmatpush1.msra.mxu0 0.0
  %477 = vmatprep.subr.mxu0 0.0
  %478 = vmatpush1.msra.mxu0 0.0
  %479 = vmatprep.subr.mxu0 0.0
  %480 = vmatpush1.msra.mxu0 0.0
  %481 = vmatprep.subr.mxu0 0.0
  %482 = vmatpush1.msra.mxu0 0.0
  %483 = vmatprep.subr.mxu0 0.0
  %484 = vmatpush1.msra.mxu0 0.0
  %485 = vmatprep.subr.mxu0 0.0
  %486 = vmatpush1.msra.mxu0 %v130
  %487 = vmatprep.subr.mxu0 0.0
  %488 = vmatpush1.msra.mxu0 %v129
  %489 = vmatprep.subr.mxu0 0.0
  %490 = vmatpush1.msra.mxu0 %v128
  %491 = vmatprep.subr.mxu0 0.0
  %492 = vmatpush1.msra.mxu0 %v127
  %493 = vmatprep.subr.mxu0 0.0
  %494 = vmatpush2.msra.mxu0 0.0
  %495 = vmatprep.subr.mxu0 0.0
  %496 = vmatpush2.msra.mxu0 0.0
  %497 = vmatprep.subr.mxu0 0.0
  %498 = vmatpush2.msra.mxu0 0.0
  %499 = vmatprep.subr.mxu0 0.0
  %500 = vmatpush2.msra.mxu0 0.0
  %501 = vmatprep.subr.mxu0 0.0
  %502 = vmatpush2.msra.mxu0 0.0
  %503 = vmatprep.subr.mxu0 0.0
  %504 = vmatpush2.msra.mxu0 0.0
  %505 = vmatprep.subr.mxu0 0.0
  %506 = vmatpush2.msra.mxu0 0.0
  %507 = vmatprep.subr.mxu0 0.0
  %508 = vmatpush2.msra.mxu0 0.0
  %509 = vmatprep.subr.mxu0 0.0
  %510 = vmatpush2.msra.mxu0 0.0
  %511 = vmatprep.subr.mxu0 0.0
  %512 = vmatpush2.msra.mxu0 0.0
  %513 = vmatprep.subr.mxu0 0.0
  %514 = vmatpush2.msra.mxu0 0.0
  %515 = vmatprep.subr.mxu0 0.0
  %516 = vmatpush2.msra.mxu0 0.0
  %517 = vmatprep.subr.mxu0 0.0
  %518 = vmatpush2.msra.mxu0 0.0
  %519 = vmatprep.subr.mxu0 0.0
  %520 = vmatpush2.msra.mxu0 0.0
  %521 = vmatprep.subr.mxu0 0.0
  %522 = vmatpush2.msra.mxu0 0.0
  %523 = vmatprep.subr.mxu0 0.0
  %524 = vmatpush2.msra.mxu0 0.0
  %525 = vmatprep.mubr.f32.mxu0 0.0
  %526 = vmatmul.mubr.f32.gmra.mxu0 %v459
  %v527 = vpop.f32.mrf.mxu0
  %v528 = vadd.f32 0.0, %v527
  %v529 = vpop.f32.mrf.mxu0
  %530 = vdwg.mxu0
  %v532 = vrot.slane %v528, 4
  %v534 = vadd.f32 %v119, %v532
  %v535 = vtanh.pop %v534
  %v537 = vrot.slane %v456, 4
  %538 = vrot.lane.b32.xlu0 %v537, 32
  %v539 = vpop.permute.xlu0 %538
  %v541 = vsel %vm146, %v535, %v539
  %v543 = vrot.slane %v541, 4
  %v544 = vsel %vm223, %v543, 0
  %546 = vmatprep.subr.mxu0 0.0
  %547 = vmatpush1.msra.mxu0 0.0
  %548 = vmatprep.subr.mxu0 0.0
  %549 = vmatpush1.msra.mxu0 0.0
  %550 = vmatprep.subr.mxu0 0.0
  %551 = vmatpush1.msra.mxu0 0.0
  %552 = vmatprep.subr.mxu0 0.0
  %553 = vmatpush1.msra.mxu0 0.0
  %554 = vmatprep.subr.mxu0 0.0
  %555 = vmatpush1.msra.mxu0 0.0
  %556 = vmatprep.subr.mxu0 0.0
  %557 = vmatpush1.msra.mxu0 0.0
  %558 = vmatprep.subr.mxu0 0.0
  %559 = vmatpush1.msra.mxu0 0.0
  %560 = vmatprep.subr.mxu0 0.0
  %561 = vmatpush1.msra.mxu0 0.0
  %562 = vmatprep.subr.mxu0 0.0
  %563 = vmatpush1.msra.mxu0 %v138
  %564 = vmatprep.subr.mxu0 0.0
  %565 = vmatpush1.msra.mxu0 %v137
  %566 = vmatprep.subr.mxu0 0.0
  %567 = vmatpush1.msra.mxu0 %v136
  %568 = vmatprep.subr.mxu0 0.0
  %569 = vmatpush1.msra.mxu0 %v135
  %570 = vmatprep.subr.mxu0 0.0
  %571 = vmatpush1.msra.mxu0 %v134
  %572 = vmatprep.subr.mxu0 0.0
  %573 = vmatpush1.msra.mxu0 %v133
  %574 = vmatprep.subr.mxu0 0.0
  %575 = vmatpush1.msra.mxu0 %v132
  %576 = vmatprep.subr.mxu0 0.0
  %577 = vmatpush1.msra.mxu0 %v131
  %578 = vmatprep.subr.mxu0 0.0
  %579 = vmatpush2.msra.mxu0 0.0
  %580 = vmatprep.subr.mxu0 0.0
  %581 = vmatpush2.msra.mxu0 0.0
  %582 = vmatprep.subr.mxu0 0.0
  %583 = vmatpush2.msra.mxu0 0.0
  %584 = vmatprep.subr.mxu0 0.0
  %585 = vmatpush2.msra.mxu0 0.0
  %586 = vmatprep.subr.mxu0 0.0
  %587 = vmatpush2.msra.mxu0 0.0
  %588 = vmatprep.subr.mxu0 0.0
  %589 = vmatpush2.msra.mxu0 0.0
  %590 = vmatprep.subr.mxu0 0.0
  %591 = vmatpush2.msra.mxu0 0.0
  %592 = vmatprep.subr.mxu0 0.0
  %593 = vmatpush2.msra.mxu0 0.0
  %594 = vmatprep.subr.mxu0 0.0
  %595 = vmatpush2.msra.mxu0 0.0
  %596 = vmatprep.subr.mxu0 0.0
  %597 = vmatpush2.msra.mxu0 0.0
  %598 = vmatprep.subr.mxu0 0.0
  %599 = vmatpush2.msra.mxu0 0.0
  %600 = vmatprep.subr.mxu0 0.0
  %601 = vmatpush2.msra.mxu0 0.0
  %602 = vmatprep.subr.mxu0 0.0
  %603 = vmatpush2.msra.mxu0 0.0
  %604 = vmatprep.subr.mxu0 0.0
  %605 = vmatpush2.msra.mxu0 0.0
  %606 = vmatprep.subr.mxu0 0.0
  %607 = vmatpush2.msra.mxu0 0.0
  %608 = vmatprep.subr.mxu0 0.0
  %609 = vmatpush2.msra.mxu0 0.0
  %610 = vmatprep.mubr.f32.mxu0 0.0
  %611 = vmatmul.mubr.f32.gmra.mxu0 %v544
  %v612 = vpop.f32.mrf.mxu0
  %v613 = vadd.f32 %v144, %v612
  %v614 = vpop.f32.mrf.mxu0
  %615 = vdwg.mxu0
  %v616 = vtanh.pop %v613
  %v618 = vrot.slane %v535, 4
  %v619 = vsel %vm146, %v618, 0
  %621 = vmatprep.subr.mxu0 0.0
  %622 = vmatpush1.msra.mxu0 0.0
  %623 = vmatprep.subr.mxu0 0.0
  %624 = vmatpush1.msra.mxu0 0.0
  %625 = vmatprep.subr.mxu0 0.0
  %626 = vmatpush1.msra.mxu0 0.0
  %627 = vmatprep.subr.mxu0 0.0
  %628 = vmatpush1.msra.mxu0 0.0
  %629 = vmatprep.subr.mxu0 0.0
  %630 = vmatpush1.msra.mxu0 0.0
  %631 = vmatprep.subr.mxu0 0.0
  %632 = vmatpush1.msra.mxu0 0.0
  %633 = vmatprep.subr.mxu0 0.0
  %634 = vmatpush1.msra.mxu0 0.0
  %635 = vmatprep.subr.mxu0 0.0
  %636 = vmatpush1.msra.mxu0 0.0
  %637 = vmatprep.subr.mxu0 0.0
  %638 = vmatpush1.msra.mxu0 0.0
  %639 = vmatprep.subr.mxu0 0.0
  %640 = vmatpush1.msra.mxu0 0.0
  %641 = vmatprep.subr.mxu0 0.0
  %642 = vmatpush1.msra.mxu0 0.0
  %643 = vmatprep.subr.mxu0 0.0
  %644 = vmatpush1.msra.mxu0 0.0
  %645 = vmatprep.subr.mxu0 0.0
  %646 = vmatpush1.msra.mxu0 %v130
  %647 = vmatprep.subr.mxu0 0.0
  %648 = vmatpush1.msra.mxu0 %v129
  %649 = vmatprep.subr.mxu0 0.0
  %650 = vmatpush1.msra.mxu0 %v128
  %651 = vmatprep.subr.mxu0 0.0
  %652 = vmatpush1.msra.mxu0 %v127
  %653 = vmatprep.subr.mxu0 0.0
  %654 = vmatpush2.msra.mxu0 0.0
  %655 = vmatprep.subr.mxu0 0.0
  %656 = vmatpush2.msra.mxu0 0.0
  %657 = vmatprep.subr.mxu0 0.0
  %658 = vmatpush2.msra.mxu0 0.0
  %659 = vmatprep.subr.mxu0 0.0
  %660 = vmatpush2.msra.mxu0 0.0
  %661 = vmatprep.subr.mxu0 0.0
  %662 = vmatpush2.msra.mxu0 0.0
  %663 = vmatprep.subr.mxu0 0.0
  %664 = vmatpush2.msra.mxu0 0.0
  %665 = vmatprep.subr.mxu0 0.0
  %666 = vmatpush2.msra.mxu0 0.0
  %667 = vmatprep.subr.mxu0 0.0
  %668 = vmatpush2.msra.mxu0 0.0
  %669 = vmatprep.subr.mxu0 0.0
  %670 = vmatpush2.msra.mxu0 0.0
  %671 = vmatprep.subr.mxu0 0.0
  %672 = vmatpush2.msra.mxu0 0.0
  %673 = vmatprep.subr.mxu0 0.0
  %674 = vmatpush2.msra.mxu0 0.0
  %675 = vmatprep.subr.mxu0 0.0
  %676 = vmatpush2.msra.mxu0 0.0
  %677 = vmatprep.subr.mxu0 0.0
  %678 = vmatpush2.msra.mxu0 0.0
  %679 = vmatprep.subr.mxu0 0.0
  %680 = vmatpush2.msra.mxu0 0.0
  %681 = vmatprep.subr.mxu0 0.0
  %682 = vmatpush2.msra.mxu0 0.0
  %683 = vmatprep.subr.mxu0 0.0
  %684 = vmatpush2.msra.mxu0 0.0
  %685 = vmatprep.mubr.f32.mxu0 0.0
  %686 = vmatmul.mubr.f32.gmra.mxu0 %v619
  %v687 = vpop.f32.mrf.mxu0
  %v688 = vadd.f32 0.0, %v687
  %v689 = vpop.f32.mrf.mxu0
  %690 = vdwg.mxu0
  %v692 = vrot.slane %v688, 2
  %v694 = vadd.f32 %v119, %v692
  %v695 = vtanh.pop %v694
  %v697 = vrot.slane %v616, 2
  %698 = vrot.lane.b32.xlu0 %v697, 32
  %v699 = vpop.permute.xlu0 %698
  %v701 = vsel %vm146, %v695, %v699
  %v703 = vrot.slane %v701, 6
  %v704 = vsel %vm223, %v703, 0
  %706 = vmatprep.subr.mxu0 0.0
  %707 = vmatpush1.msra.mxu0 0.0
  %708 = vmatprep.subr.mxu0 0.0
  %709 = vmatpush1.msra.mxu0 0.0
  %710 = vmatprep.subr.mxu0 0.0
  %711 = vmatpush1.msra.mxu0 0.0
  %712 = vmatprep.subr.mxu0 0.0
  %713 = vmatpush1.msra.mxu0 0.0
  %714 = vmatprep.subr.mxu0 0.0
  %715 = vmatpush1.msra.mxu0 0.0
  %716 = vmatprep.subr.mxu0 0.0
  %717 = vmatpush1.msra.mxu0 0.0
  %718 = vmatprep.subr.mxu0 0.0
  %719 = vmatpush1.msra.mxu0 0.0
  %720 = vmatprep.subr.mxu0 0.0
  %721 = vmatpush1.msra.mxu0 0.0
  %722 = vmatprep.subr.mxu0 0.0
  %723 = vmatpush1.msra.mxu0 %v138
  %724 = vmatprep.subr.mxu0 0.0
  %725 = vmatpush1.msra.mxu0 %v137
  %726 = vmatprep.subr.mxu0 0.0
  %727 = vmatpush1.msra.mxu0 %v136
  %728 = vmatprep.subr.mxu0 0.0
  %729 = vmatpush1.msra.mxu0 %v135
  %730 = vmatprep.subr.mxu0 0.0
  %731 = vmatpush1.msra.mxu0 %v134
  %732 = vmatprep.subr.mxu0 0.0
  %733 = vmatpush1.msra.mxu0 %v133
  %734 = vmatprep.subr.mxu0 0.0
  %735 = vmatpush1.msra.mxu0 %v132
  %736 = vmatprep.subr.mxu0 0.0
  %737 = vmatpush1.msra.mxu0 %v131
  %738 = vmatprep.subr.mxu0 0.0
  %739 = vmatpush2.msra.mxu0 0.0
  %740 = vmatprep.subr.mxu0 0.0
  %741 = vmatpush2.msra.mxu0 0.0
  %742 = vmatprep.subr.mxu0 0.0
  %743 = vmatpush2.msra.mxu0 0.0
  %744 = vmatprep.subr.mxu0 0.0
  %745 = vmatpush2.msra.mxu0 0.0
  %746 = vmatprep.subr.mxu0 0.0
  %747 = vmatpush2.msra.mxu0 0.0
  %748 = vmatprep.subr.mxu0 0.0
  %749 = vmatpush2.msra.mxu0 0.0
  %750 = vmatprep.subr.mxu0 0.0
  %751 = vmatpush2.msra.mxu0 0.0
  %752 = vmatprep.subr.mxu0 0.0
  %753 = vmatpush2.msra.mxu0 0.0
  %754 = vmatprep.subr.mxu0 0.0
  %755 = vmatpush2.msra.mxu0 0.0
  %756 = vmatprep.subr.mxu0 0.0
  %757 = vmatpush2.msra.mxu0 0.0
  %758 = vmatprep.subr.mxu0 0.0
  %759 = vmatpush2.msra.mxu0 0.0
  %760 = vmatprep.subr.mxu0 0.0
  %761 = vmatpush2.msra.mxu0 0.0
  %762 = vmatprep.subr.mxu0 0.0
  %763 = vmatpush2.msra.mxu0 0.0
  %764 = vmatprep.subr.mxu0 0.0
  %765 = vmatpush2.msra.mxu0 0.0
  %766 = vmatprep.subr.mxu0 0.0
  %767 = vmatpush2.msra.mxu0 0.0
  %768 = vmatprep.subr.mxu0 0.0
  %769 = vmatpush2.msra.mxu0 0.0
  %770 = vmatprep.mubr.f32.mxu0 0.0
  %771 = vmatmul.mubr.f32.gmra.mxu0 %v704
  %v772 = vpop.f32.mrf.mxu0
  %v773 = vadd.f32 %v144, %v772
  %v774 = vpop.f32.mrf.mxu0
  %775 = vdwg.mxu0
  %v776 = vtanh.pop %v773
  %v778 = vrot.slane %v695, 6
  %v779 = vsel %vm146, %v778, 0
  %781 = vmatprep.subr.mxu0 0.0
  %782 = vmatpush1.msra.mxu0 0.0
  %783 = vmatprep.subr.mxu0 0.0
  %784 = vmatpush1.msra.mxu0 0.0
  %785 = vmatprep.subr.mxu0 0.0
  %786 = vmatpush1.msra.mxu0 0.0
  %787 = vmatprep.subr.mxu0 0.0
  %788 = vmatpush1.msra.mxu0 0.0
  %789 = vmatprep.subr.mxu0 0.0
  %790 = vmatpush1.msra.mxu0 0.0
  %791 = vmatprep.subr.mxu0 0.0
  %792 = vmatpush1.msra.mxu0 0.0
  %793 = vmatprep.subr.mxu0 0.0
  %794 = vmatpush1.msra.mxu0 0.0
  %795 = vmatprep.subr.mxu0 0.0
  %796 = vmatpush1.msra.mxu0 0.0
  %797 = vmatprep.subr.mxu0 0.0
  %798 = vmatpush1.msra.mxu0 0.0
  %799 = vmatprep.subr.mxu0 0.0
  %800 = vmatpush1.msra.mxu0 0.0
  %801 = vmatprep.subr.mxu0 0.0
  %802 = vmatpush1.msra.mxu0 0.0
  %803 = vmatprep.subr.mxu0 0.0
  %804 = vmatpush1.msra.mxu0 0.0
  %805 = vmatprep.subr.mxu0 0.0
  %806 = vmatpush1.msra.mxu0 %v130
  %807 = vmatprep.subr.mxu0 0.0
  %808 = vmatpush1.msra.mxu0 %v129
  %809 = vmatprep.subr.mxu0 0.0
  %810 = vmatpush1.msra.mxu0 %v128
  %811 = vmatprep.subr.mxu0 0.0
  %812 = vmatpush1.msra.mxu0 %v127
  %813 = vmatprep.subr.mxu0 0.0
  %814 = vmatpush2.msra.mxu0 0.0
  %815 = vmatprep.subr.mxu0 0.0
  %816 = vmatpush2.msra.mxu0 0.0
  %817 = vmatprep.subr.mxu0 0.0
  %818 = vmatpush2.msra.mxu0 0.0
  %819 = vmatprep.subr.mxu0 0.0
  %820 = vmatpush2.msra.mxu0 0.0
  %821 = vmatprep.subr.mxu0 0.0
  %822 = vmatpush2.msra.mxu0 0.0
  %823 = vmatprep.subr.mxu0 0.0
  %824 = vmatpush2.msra.mxu0 0.0
  %825 = vmatprep.subr.mxu0 0.0
  %826 = vmatpush2.msra.mxu0 0.0
  %827 = vmatprep.subr.mxu0 0.0
  %828 = vmatpush2.msra.mxu0 0.0
  %829 = vmatprep.subr.mxu0 0.0
  %830 = vmatpush2.msra.mxu0 0.0
  %831 = vmatprep.subr.mxu0 0.0
  %832 = vmatpush2.msra.mxu0 0.0
  %833 = vmatprep.subr.mxu0 0.0
  %834 = vmatpush2.msra.mxu0 0.0
  %835 = vmatprep.subr.mxu0 0.0
  %836 = vmatpush2.msra.mxu0 0.0
  %837 = vmatprep.subr.mxu0 0.0
  %838 = vmatpush2.msra.mxu0 0.0
  %839 = vmatprep.subr.mxu0 0.0
  %840 = vmatpush2.msra.mxu0 0.0
  %841 = vmatprep.subr.mxu0 0.0
  %842 = vmatpush2.msra.mxu0 0.0
  %843 = vmatprep.subr.mxu0 0.0
  %844 = vmatpush2.msra.mxu0 0.0
  %845 = vmatprep.mubr.f32.mxu0 0.0
  %846 = vmatmul.mubr.f32.gmra.mxu0 %v779
  %v847 = vpop.f32.mrf.mxu0
  %v848 = vadd.f32 0.0, %v847
  %v849 = vpop.f32.mrf.mxu0
  %850 = vdwg.mxu0
  %v851 = vadd.f32 %v124, %v848
  %v852 = vtanh.pop %v851
  %854 = vrot.lane.b32.xlu0 %v776, 32
  %v855 = vpop.permute.xlu0 %854
  %v857 = vsel %vm146, %v852, %v855
  %v859 = vsel %vm223, %v857, 0
  %861 = vmatprep.subr.mxu0 0.0
  %862 = vmatpush1.msra.mxu0 0.0
  %863 = vmatprep.subr.mxu0 0.0
  %864 = vmatpush1.msra.mxu0 0.0
  %865 = vmatprep.subr.mxu0 0.0
  %866 = vmatpush1.msra.mxu0 0.0
  %867 = vmatprep.subr.mxu0 0.0
  %868 = vmatpush1.msra.mxu0 0.0
  %869 = vmatprep.subr.mxu0 0.0
  %870 = vmatpush1.msra.mxu0 0.0
  %871 = vmatprep.subr.mxu0 0.0
  %872 = vmatpush1.msra.mxu0 0.0
  %873 = vmatprep.subr.mxu0 0.0
  %874 = vmatpush1.msra.mxu0 0.0
  %875 = vmatprep.subr.mxu0 0.0
  %876 = vmatpush1.msra.mxu0 0.0
  %877 = vmatprep.subr.mxu0 0.0
  %878 = vmatpush1.msra.mxu0 %v138
  %879 = vmatprep.subr.mxu0 0.0
  %880 = vmatpush1.msra.mxu0 %v137
  %881 = vmatprep.subr.mxu0 0.0
  %882 = vmatpush1.msra.mxu0 %v136
  %883 = vmatprep.subr.mxu0 0.0
  %884 = vmatpush1.msra.mxu0 %v135
  %885 = vmatprep.subr.mxu0 0.0
  %886 = vmatpush1.msra.mxu0 %v134
  %887 = vmatprep.subr.mxu0 0.0
  %888 = vmatpush1.msra.mxu0 %v133
  %889 = vmatprep.subr.mxu0 0.0
  %890 = vmatpush1.msra.mxu0 %v132
  %891 = vmatprep.subr.mxu0 0.0
  %892 = vmatpush1.msra.mxu0 %v131
  %893 = vmatprep.subr.mxu0 0.0
  %894 = vmatpush2.msra.mxu0 0.0
  %895 = vmatprep.subr.mxu0 0.0
  %896 = vmatpush2.msra.mxu0 0.0
  %897 = vmatprep.subr.mxu0 0.0
  %898 = vmatpush2.msra.mxu0 0.0
  %899 = vmatprep.subr.mxu0 0.0
  %900 = vmatpush2.msra.mxu0 0.0
  %901 = vmatprep.subr.mxu0 0.0
  %902 = vmatpush2.msra.mxu0 0.0
  %903 = vmatprep.subr.mxu0 0.0
  %904 = vmatpush2.msra.mxu0 0.0
  %905 = vmatprep.subr.mxu0 0.0
  %906 = vmatpush2.msra.mxu0 0.0
  %907 = vmatprep.subr.mxu0 0.0
  %908 = vmatpush2.msra.mxu0 0.0
  %909 = vmatprep.subr.mxu0 0.0
  %910 = vmatpush2.msra.mxu0 0.0
  %911 = vmatprep.subr.mxu0 0.0
  %912 = vmatpush2.msra.mxu0 0.0
  %913 = vmatprep.subr.mxu0 0.0
  %914 = vmatpush2.msra.mxu0 0.0
  %915 = vmatprep.subr.mxu0 0.0
  %916 = vmatpush2.msra.mxu0 0.0
  %917 = vmatprep.subr.mxu0 0.0
  %918 = vmatpush2.msra.mxu0 0.0
  %919 = vmatprep.subr.mxu0 0.0
  %920 = vmatpush2.msra.mxu0 0.0
  %921 = vmatprep.subr.mxu0 0.0
  %922 = vmatpush2.msra.mxu0 0.0
  %923 = vmatprep.subr.mxu0 0.0
  %924 = vmatpush2.msra.mxu0 0.0
  %925 = vmatprep.mubr.f32.mxu0 0.0
  %926 = vmatmul.mubr.f32.gmra.mxu0 %v859
  %v927 = vpop.f32.mrf.mxu0
  %v928 = vadd.f32 %v144, %v927
  %v929 = vpop.f32.mrf.mxu0
  %930 = vdwg.mxu0
  %v931 = vtanh.pop %v928
  %v933 = vsel %vm146, %v852, 0
  %935 = vmatprep.subr.mxu0 0.0
  %936 = vmatpush1.msra.mxu0 0.0
  %937 = vmatprep.subr.mxu0 0.0
  %938 = vmatpush1.msra.mxu0 0.0
  %939 = vmatprep.subr.mxu0 0.0
  %940 = vmatpush1.msra.mxu0 0.0
  %941 = vmatprep.subr.mxu0 0.0
  %942 = vmatpush1.msra.mxu0 0.0
  %943 = vmatprep.subr.mxu0 0.0
  %944 = vmatpush1.msra.mxu0 0.0
  %945 = vmatprep.subr.mxu0 0.0
  %946 = vmatpush1.msra.mxu0 0.0
  %947 = vmatprep.subr.mxu0 0.0
  %948 = vmatpush1.msra.mxu0 0.0
  %949 = vmatprep.subr.mxu0 0.0
  %950 = vmatpush1.msra.mxu0 0.0
  %951 = vmatprep.subr.mxu0 0.0
  %952 = vmatpush1.msra.mxu0 0.0
  %953 = vmatprep.subr.mxu0 0.0
  %954 = vmatpush1.msra.mxu0 0.0
  %955 = vmatprep.subr.mxu0 0.0
  %956 = vmatpush1.msra.mxu0 0.0
  %957 = vmatprep.subr.mxu0 0.0
  %958 = vmatpush1.msra.mxu0 0.0
  %959 = vmatprep.subr.mxu0 0.0
  %960 = vmatpush1.msra.mxu0 %v130
  %961 = vmatprep.subr.mxu0 0.0
  %962 = vmatpush1.msra.mxu0 %v129
  %963 = vmatprep.subr.mxu0 0.0
  %964 = vmatpush1.msra.mxu0 %v128
  %965 = vmatprep.subr.mxu0 0.0
  %966 = vmatpush1.msra.mxu0 %v127
  %967 = vmatprep.subr.mxu0 0.0
  %968 = vmatpush2.msra.mxu0 0.0
  %969 = vmatprep.subr.mxu0 0.0
  %970 = vmatpush2.msra.mxu0 0.0
  %971 = vmatprep.subr.mxu0 0.0
  %972 = vmatpush2.msra.mxu0 0.0
  %973 = vmatprep.subr.mxu0 0.0
  %974 = vmatpush2.msra.mxu0 0.0
  %975 = vmatprep.subr.mxu0 0.0
  %976 = vmatpush2.msra.mxu0 0.0
  %977 = vmatprep.subr.mxu0 0.0
  %978 = vmatpush2.msra.mxu0 0.0
  %979 = vmatprep.subr.mxu0 0.0
  %980 = vmatpush2.msra.mxu0 0.0
  %981 = vmatprep.subr.mxu0 0.0
  %982 = vmatpush2.msra.mxu0 0.0
  %983 = vmatprep.subr.mxu0 0.0
  %984 = vmatpush2.msra.mxu0 0.0
  %985 = vmatprep.subr.mxu0 0.0
  %986 = vmatpush2.msra.mxu0 0.0
  %987 = vmatprep.subr.mxu0 0.0
  %988 = vmatpush2.msra.mxu0 0.0
  %989 = vmatprep.subr.mxu0 0.0
  %990 = vmatpush2.msra.mxu0 0.0
  %991 = vmatprep.subr.mxu0 0.0
  %992 = vmatpush2.msra.mxu0 0.0
  %993 = vmatprep.subr.mxu0 0.0
  %994 = vmatpush2.msra.mxu0 0.0
  %995 = vmatprep.subr.mxu0 0.0
  %996 = vmatpush2.msra.mxu0 0.0
  %997 = vmatprep.subr.mxu0 0.0
  %998 = vmatpush2.msra.mxu0 0.0
  %999 = vmatprep.mubr.f32.mxu0 0.0
  %1000 = vmatmul.mubr.f32.gmra.mxu0 %v933
  %v1001 = vpop.f32.mrf.mxu0
  %v1002 = vadd.f32 0.0, %v1001
  %v1003 = vpop.f32.mrf.mxu0
  %1004 = vdwg.mxu0
  %v1006 = vrot.slane %v1002, 6
  %v1008 = vadd.f32 %v124, %v1006
  %v1009 = vtanh.pop %v1008
  %v1011 = vrot.slane %v931, 6
  %1012 = vrot.lane.b32.xlu0 %v1011, 32
  %v1013 = vpop.permute.xlu0 %1012
  %v1015 = vsel %vm146, %v1009, %v1013
  %v1017 = vrot.slane %v1015, 2
  %v1018 = vsel %vm223, %v1017, 0
  %1020 = vmatprep.subr.mxu0 0.0
  %1021 = vmatpush1.msra.mxu0 0.0
  %1022 = vmatprep.subr.mxu0 0.0
  %1023 = vmatpush1.msra.mxu0 0.0
  %1024 = vmatprep.subr.mxu0 0.0
  %1025 = vmatpush1.msra.mxu0 0.0
  %1026 = vmatprep.subr.mxu0 0.0
  %1027 = vmatpush1.msra.mxu0 0.0
  %1028 = vmatprep.subr.mxu0 0.0
  %1029 = vmatpush1.msra.mxu0 0.0
  %1030 = vmatprep.subr.mxu0 0.0
  %1031 = vmatpush1.msra.mxu0 0.0
  %1032 = vmatprep.subr.mxu0 0.0
  %1033 = vmatpush1.msra.mxu0 0.0
  %1034 = vmatprep.subr.mxu0 0.0
  %1035 = vmatpush1.msra.mxu0 0.0
  %1036 = vmatprep.subr.mxu0 0.0
  %1037 = vmatpush1.msra.mxu0 %v138
  %1038 = vmatprep.subr.mxu0 0.0
  %1039 = vmatpush1.msra.mxu0 %v137
  %1040 = vmatprep.subr.mxu0 0.0
  %1041 = vmatpush1.msra.mxu0 %v136
  %1042 = vmatprep.subr.mxu0 0.0
  %1043 = vmatpush1.msra.mxu0 %v135
  %1044 = vmatprep.subr.mxu0 0.0
  %1045 = vmatpush1.msra.mxu0 %v134
  %1046 = vmatprep.subr.mxu0 0.0
  %1047 = vmatpush1.msra.mxu0 %v133
  %1048 = vmatprep.subr.mxu0 0.0
  %1049 = vmatpush1.msra.mxu0 %v132
  %1050 = vmatprep.subr.mxu0 0.0
  %1051 = vmatpush1.msra.mxu0 %v131
  %1052 = vmatprep.subr.mxu0 0.0
  %1053 = vmatpush2.msra.mxu0 0.0
  %1054 = vmatprep.subr.mxu0 0.0
  %1055 = vmatpush2.msra.mxu0 0.0
  %1056 = vmatprep.subr.mxu0 0.0
  %1057 = vmatpush2.msra.mxu0 0.0
  %1058 = vmatprep.subr.mxu0 0.0
  %1059 = vmatpush2.msra.mxu0 0.0
  %1060 = vmatprep.subr.mxu0 0.0
  %1061 = vmatpush2.msra.mxu0 0.0
  %1062 = vmatprep.subr.mxu0 0.0
  %1063 = vmatpush2.msra.mxu0 0.0
  %1064 = vmatprep.subr.mxu0 0.0
  %1065 = vmatpush2.msra.mxu0 0.0
  %1066 = vmatprep.subr.mxu0 0.0
  %1067 = vmatpush2.msra.mxu0 0.0
  %1068 = vmatprep.subr.mxu0 0.0
  %1069 = vmatpush2.msra.mxu0 0.0
  %1070 = vmatprep.subr.mxu0 0.0
  %1071 = vmatpush2.msra.mxu0 0.0
  %1072 = vmatprep.subr.mxu0 0.0
  %1073 = vmatpush2.msra.mxu0 0.0
  %1074 = vmatprep.subr.mxu0 0.0
  %1075 = vmatpush2.msra.mxu0 0.0
  %1076 = vmatprep.subr.mxu0 0.0
  %1077 = vmatpush2.msra.mxu0 0.0
  %1078 = vmatprep.subr.mxu0 0.0
  %1079 = vmatpush2.msra.mxu0 0.0
  %1080 = vmatprep.subr.mxu0 0.0
  %1081 = vmatpush2.msra.mxu0 0.0
  %1082 = vmatprep.subr.mxu0 0.0
  %1083 = vmatpush2.msra.mxu0 0.0
  %1084 = vmatprep.mubr.f32.mxu0 0.0
  %1085 = vmatmul.mubr.f32.gmra.mxu0 %v1018
  %v1086 = vpop.f32.mrf.mxu0
  %v1087 = vadd.f32 %v144, %v1086
  %v1088 = vpop.f32.mrf.mxu0
  %1089 = vdwg.mxu0
  %v1090 = vtanh.pop %v1087
  %v1092 = vrot.slane %v1009, 2
  %v1093 = vsel %vm146, %v1092, 0
  %1095 = vmatprep.subr.mxu0 0.0
  %1096 = vmatpush1.msra.mxu0 0.0
  %1097 = vmatprep.subr.mxu0 0.0
  %1098 = vmatpush1.msra.mxu0 0.0
  %1099 = vmatprep.subr.mxu0 0.0
  %1100 = vmatpush1.msra.mxu0 0.0
  %1101 = vmatprep.subr.mxu0 0.0
  %1102 = vmatpush1.msra.mxu0 0.0
  %1103 = vmatprep.subr.mxu0 0.0
  %1104 = vmatpush1.msra.mxu0 0.0
  %1105 = vmatprep.subr.mxu0 0.0
  %1106 = vmatpush1.msra.mxu0 0.0
  %1107 = vmatprep.subr.mxu0 0.0
  %1108 = vmatpush1.msra.mxu0 0.0
  %1109 = vmatprep.subr.mxu0 0.0
  %1110 = vmatpush1.msra.mxu0 0.0
  %1111 = vmatprep.subr.mxu0 0.0
  %1112 = vmatpush1.msra.mxu0 0.0
  %1113 = vmatprep.subr.mxu0 0.0
  %1114 = vmatpush1.msra.mxu0 0.0
  %1115 = vmatprep.subr.mxu0 0.0
  %1116 = vmatpush1.msra.mxu0 0.0
  %1117 = vmatprep.subr.mxu0 0.0
  %1118 = vmatpush1.msra.mxu0 0.0
  %1119 = vmatprep.subr.mxu0 0.0
  %1120 = vmatpush1.msra.mxu0 %v130
  %1121 = vmatprep.subr.mxu0 0.0
  %1122 = vmatpush1.msra.mxu0 %v129
  %1123 = vmatprep.subr.mxu0 0.0
  %1124 = vmatpush1.msra.mxu0 %v128
  %1125 = vmatprep.subr.mxu0 0.0
  %1126 = vmatpush1.msra.mxu0 %v127
  %1127 = vmatprep.subr.mxu0 0.0
  %1128 = vmatpush2.msra.mxu0 0.0
  %1129 = vmatprep.subr.mxu0 0.0
  %1130 = vmatpush2.msra.mxu0 0.0
  %1131 = vmatprep.subr.mxu0 0.0
  %1132 = vmatpush2.msra.mxu0 0.0
  %1133 = vmatprep.subr.mxu0 0.0
  %1134 = vmatpush2.msra.mxu0 0.0
  %1135 = vmatprep.subr.mxu0 0.0
  %1136 = vmatpush2.msra.mxu0 0.0
  %1137 = vmatprep.subr.mxu0 0.0
  %1138 = vmatpush2.msra.mxu0 0.0
  %1139 = vmatprep.subr.mxu0 0.0
  %1140 = vmatpush2.msra.mxu0 0.0
  %1141 = vmatprep.subr.mxu0 0.0
  %1142 = vmatpush2.msra.mxu0 0.0
  %1143 = vmatprep.subr.mxu0 0.0
  %1144 = vmatpush2.msra.mxu0 0.0
  %1145 = vmatprep.subr.mxu0 0.0
  %1146 = vmatpush2.msra.mxu0 0.0
  %1147 = vmatprep.subr.mxu0 0.0
  %1148 = vmatpush2.msra.mxu0 0.0
  %1149 = vmatprep.subr.mxu0 0.0
  %1150 = vmatpush2.msra.mxu0 0.0
  %1151 = vmatprep.subr.mxu0 0.0
  %1152 = vmatpush2.msra.mxu0 0.0
  %1153 = vmatprep.subr.mxu0 0.0
  %1154 = vmatpush2.msra.mxu0 0.0
  %1155 = vmatprep.subr.mxu0 0.0
  %1156 = vmatpush2.msra.mxu0 0.0
  %1157 = vmatprep.subr.mxu0 0.0
  %1158 = vmatpush2.msra.mxu0 0.0
  %1159 = vmatprep.mubr.f32.mxu0 0.0
  %1160 = vmatmul.mubr.f32.gmra.mxu0 %v1093
  %v1161 = vpop.f32.mrf.mxu0
  %v1162 = vadd.f32 0.0, %v1161
  %v1163 = vpop.f32.mrf.mxu0
  %1164 = vdwg.mxu0
  %v1166 = vrot.slane %v1162, 4
  %v1168 = vadd.f32 %v124, %v1166
  %v1169 = vtanh.pop %v1168
  %v1171 = vrot.slane %v1090, 4
  %1172 = vrot.lane.b32.xlu0 %v1171, 32
  %v1173 = vpop.permute.xlu0 %1172
  %v1175 = vsel %vm146, %v1169, %v1173
  %v1177 = vrot.slane %v1175, 4
  %v1178 = vsel %vm223, %v1177, 0
  %1180 = vmatprep.subr.mxu0 0.0
  %1181 = vmatpush1.msra.mxu0 0.0
  %1182 = vmatprep.subr.mxu0 0.0
  %1183 = vmatpush1.msra.mxu0 0.0
  %1184 = vmatprep.subr.mxu0 0.0
  %1185 = vmatpush1.msra.mxu0 0.0
  %1186 = vmatprep.subr.mxu0 0.0
  %1187 = vmatpush1.msra.mxu0 0.0
  %1188 = vmatprep.subr.mxu0 0.0
  %1189 = vmatpush1.msra.mxu0 0.0
  %1190 = vmatprep.subr.mxu0 0.0
  %1191 = vmatpush1.msra.mxu0 0.0
  %1192 = vmatprep.subr.mxu0 0.0
  %1193 = vmatpush1.msra.mxu0 0.0
  %1194 = vmatprep.subr.mxu0 0.0
  %1195 = vmatpush1.msra.mxu0 0.0
  %1196 = vmatprep.subr.mxu0 0.0
  %1197 = vmatpush1.msra.mxu0 %v138
  %1198 = vmatprep.subr.mxu0 0.0
  %1199 = vmatpush1.msra.mxu0 %v137
  %1200 = vmatprep.subr.mxu0 0.0
  %1201 = vmatpush1.msra.mxu0 %v136
  %1202 = vmatprep.subr.mxu0 0.0
  %1203 = vmatpush1.msra.mxu0 %v135
  %1204 = vmatprep.subr.mxu0 0.0
  %1205 = vmatpush1.msra.mxu0 %v134
  %1206 = vmatprep.subr.mxu0 0.0
  %1207 = vmatpush1.msra.mxu0 %v133
  %1208 = vmatprep.subr.mxu0 0.0
  %1209 = vmatpush1.msra.mxu0 %v132
  %1210 = vmatprep.subr.mxu0 0.0
  %1211 = vmatpush1.msra.mxu0 %v131
  %1212 = vmatprep.subr.mxu0 0.0
  %1213 = vmatpush2.msra.mxu0 0.0
  %1214 = vmatprep.subr.mxu0 0.0
  %1215 = vmatpush2.msra.mxu0 0.0
  %1216 = vmatprep.subr.mxu0 0.0
  %1217 = vmatpush2.msra.mxu0 0.0
  %1218 = vmatprep.subr.mxu0 0.0
  %1219 = vmatpush2.msra.mxu0 0.0
  %1220 = vmatprep.subr.mxu0 0.0
  %1221 = vmatpush2.msra.mxu0 0.0
  %1222 = vmatprep.subr.mxu0 0.0
  %1223 = vmatpush2.msra.mxu0 0.0
  %1224 = vmatprep.subr.mxu0 0.0
  %1225 = vmatpush2.msra.mxu0 0.0
  %1226 = vmatprep.subr.mxu0 0.0
  %1227 = vmatpush2.msra.mxu0 0.0
  %1228 = vmatprep.subr.mxu0 0.0
  %1229 = vmatpush2.msra.mxu0 0.0
  %1230 = vmatprep.subr.mxu0 0.0
  %1231 = vmatpush2.msra.mxu0 0.0
  %1232 = vmatprep.subr.mxu0 0.0
  %1233 = vmatpush2.msra.mxu0 0.0
  %1234 = vmatprep.subr.mxu0 0.0
  %1235 = vmatpush2.msra.mxu0 0.0
  %1236 = vmatprep.subr.mxu0 0.0
  %1237 = vmatpush2.msra.mxu0 0.0
  %1238 = vmatprep.subr.mxu0 0.0
  %1239 = vmatpush2.msra.mxu0 0.0
  %1240 = vmatprep.subr.mxu0 0.0
  %1241 = vmatpush2.msra.mxu0 0.0
  %1242 = vmatprep.subr.mxu0 0.0
  %1243 = vmatpush2.msra.mxu0 0.0
  %1244 = vmatprep.mubr.f32.mxu0 0.0
  %1245 = vmatmul.mubr.f32.gmra.mxu0 %v1178
  %v1246 = vpop.f32.mrf.mxu0
  %v1247 = vadd.f32 %v144, %v1246
  %v1248 = vpop.f32.mrf.mxu0
  %1249 = vdwg.mxu0
  %v1250 = vtanh.pop %v1247
  %v1252 = vrot.slane %v1169, 4
  %v1253 = vsel %vm146, %v1252, 0
  %1255 = vmatprep.subr.mxu0 0.0
  %1256 = vmatpush1.msra.mxu0 0.0
  %1257 = vmatprep.subr.mxu0 0.0
  %1258 = vmatpush1.msra.mxu0 0.0
  %1259 = vmatprep.subr.mxu0 0.0
  %1260 = vmatpush1.msra.mxu0 0.0
  %1261 = vmatprep.subr.mxu0 0.0
  %1262 = vmatpush1.msra.mxu0 0.0
  %1263 = vmatprep.subr.mxu0 0.0
  %1264 = vmatpush1.msra.mxu0 0.0
  %1265 = vmatprep.subr.mxu0 0.0
  %1266 = vmatpush1.msra.mxu0 0.0
  %1267 = vmatprep.subr.mxu0 0.0
  %1268 = vmatpush1.msra.mxu0 0.0
  %1269 = vmatprep.subr.mxu0 0.0
  %1270 = vmatpush1.msra.mxu0 0.0
  %1271 = vmatprep.subr.mxu0 0.0
  %1272 = vmatpush1.msra.mxu0 0.0
  %1273 = vmatprep.subr.mxu0 0.0
  %1274 = vmatpush1.msra.mxu0 0.0
  %1275 = vmatprep.subr.mxu0 0.0
  %1276 = vmatpush1.msra.mxu0 0.0
  %1277 = vmatprep.subr.mxu0 0.0
  %1278 = vmatpush1.msra.mxu0 0.0
  %1279 = vmatprep.subr.mxu0 0.0
  %1280 = vmatpush1.msra.mxu0 %v130
  %1281 = vmatprep.subr.mxu0 0.0
  %1282 = vmatpush1.msra.mxu0 %v129
  %1283 = vmatprep.subr.mxu0 0.0
  %1284 = vmatpush1.msra.mxu0 %v128
  %1285 = vmatprep.subr.mxu0 0.0
  %1286 = vmatpush1.msra.mxu0 %v127
  %1287 = vmatprep.subr.mxu0 0.0
  %1288 = vmatpush2.msra.mxu0 0.0
  %1289 = vmatprep.subr.mxu0 0.0
  %1290 = vmatpush2.msra.mxu0 0.0
  %1291 = vmatprep.subr.mxu0 0.0
  %1292 = vmatpush2.msra.mxu0 0.0
  %1293 = vmatprep.subr.mxu0 0.0
  %1294 = vmatpush2.msra.mxu0 0.0
  %1295 = vmatprep.subr.mxu0 0.0
  %1296 = vmatpush2.msra.mxu0 0.0
  %1297 = vmatprep.subr.mxu0 0.0
  %1298 = vmatpush2.msra.mxu0 0.0
  %1299 = vmatprep.subr.mxu0 0.0
  %1300 = vmatpush2.msra.mxu0 0.0
  %1301 = vmatprep.subr.mxu0 0.0
  %1302 = vmatpush2.msra.mxu0 0.0
  %1303 = vmatprep.subr.mxu0 0.0
  %1304 = vmatpush2.msra.mxu0 0.0
  %1305 = vmatprep.subr.mxu0 0.0
  %1306 = vmatpush2.msra.mxu0 0.0
  %1307 = vmatprep.subr.mxu0 0.0
  %1308 = vmatpush2.msra.mxu0 0.0
  %1309 = vmatprep.subr.mxu0 0.0
  %1310 = vmatpush2.msra.mxu0 0.0
  %1311 = vmatprep.subr.mxu0 0.0
  %1312 = vmatpush2.msra.mxu0 0.0
  %1313 = vmatprep.subr.mxu0 0.0
  %1314 = vmatpush2.msra.mxu0 0.0
  %1315 = vmatprep.subr.mxu0 0.0
  %1316 = vmatpush2.msra.mxu0 0.0
  %1317 = vmatprep.subr.mxu0 0.0
  %1318 = vmatpush2.msra.mxu0 0.0
  %1319 = vmatprep.mubr.f32.mxu0 0.0
  %1320 = vmatmul.mubr.f32.gmra.mxu0 %v1253
  %v1321 = vpop.f32.mrf.mxu0
  %v1322 = vadd.f32 0.0, %v1321
  %v1323 = vpop.f32.mrf.mxu0
  %1324 = vdwg.mxu0
  %v1326 = vrot.slane %v1322, 2
  %v1328 = vadd.f32 %v124, %v1326
  %v1329 = vtanh.pop %v1328
  %v1331 = vrot.slane %v1250, 2
  %1332 = vrot.lane.b32.xlu0 %v1331, 32
  %v1333 = vpop.permute.xlu0 %1332
  %v1335 = vsel %vm146, %v1329, %v1333
  %v1337 = vrot.slane %v1335, 6
  %v1338 = vsel %vm223, %v1337, 0
  %1340 = vmatprep.subr.mxu0 0.0
  %1341 = vmatpush1.msra.mxu0 0.0
  %1342 = vmatprep.subr.mxu0 0.0
  %1343 = vmatpush1.msra.mxu0 0.0
  %1344 = vmatprep.subr.mxu0 0.0
  %1345 = vmatpush1.msra.mxu0 0.0
  %1346 = vmatprep.subr.mxu0 0.0
  %1347 = vmatpush1.msra.mxu0 0.0
  %1348 = vmatprep.subr.mxu0 0.0
  %1349 = vmatpush1.msra.mxu0 0.0
  %1350 = vmatprep.subr.mxu0 0.0
  %1351 = vmatpush1.msra.mxu0 0.0
  %1352 = vmatprep.subr.mxu0 0.0
  %1353 = vmatpush1.msra.mxu0 0.0
  %1354 = vmatprep.subr.mxu0 0.0
  %1355 = vmatpush1.msra.mxu0 0.0
  %1356 = vmatprep.subr.mxu0 0.0
  %1357 = vmatpush1.msra.mxu0 %v138
  %1358 = vmatprep.subr.mxu0 0.0
  %1359 = vmatpush1.msra.mxu0 %v137
  %1360 = vmatprep.subr.mxu0 0.0
  %1361 = vmatpush1.msra.mxu0 %v136
  %1362 = vmatprep.subr.mxu0 0.0
  %1363 = vmatpush1.msra.mxu0 %v135
  %1364 = vmatprep.subr.mxu0 0.0
  %1365 = vmatpush1.msra.mxu0 %v134
  %1366 = vmatprep.subr.mxu0 0.0
  %1367 = vmatpush1.msra.mxu0 %v133
  %1368 = vmatprep.subr.mxu0 0.0
  %1369 = vmatpush1.msra.mxu0 %v132
  %1370 = vmatprep.subr.mxu0 0.0
  %1371 = vmatpush1.msra.mxu0 %v131
  %1372 = vmatprep.subr.mxu0 0.0
  %1373 = vmatpush2.msra.mxu0 0.0
  %1374 = vmatprep.subr.mxu0 0.0
  %1375 = vmatpush2.msra.mxu0 0.0
  %1376 = vmatprep.subr.mxu0 0.0
  %1377 = vmatpush2.msra.mxu0 0.0
  %1378 = vmatprep.subr.mxu0 0.0
  %1379 = vmatpush2.msra.mxu0 0.0
  %1380 = vmatprep.subr.mxu0 0.0
  %1381 = vmatpush2.msra.mxu0 0.0
  %1382 = vmatprep.subr.mxu0 0.0
  %1383 = vmatpush2.msra.mxu0 0.0
  %1384 = vmatprep.subr.mxu0 0.0
  %1385 = vmatpush2.msra.mxu0 0.0
  %1386 = vmatprep.subr.mxu0 0.0
  %1387 = vmatpush2.msra.mxu0 0.0
  %1388 = vmatprep.subr.mxu0 0.0
  %1389 = vmatpush2.msra.mxu0 0.0
  %1390 = vmatprep.subr.mxu0 0.0
  %1391 = vmatpush2.msra.mxu0 0.0
  %1392 = vmatprep.subr.mxu0 0.0
  %1393 = vmatpush2.msra.mxu0 0.0
  %1394 = vmatprep.subr.mxu0 0.0
  %1395 = vmatpush2.msra.mxu0 0.0
  %1396 = vmatprep.subr.mxu0 0.0
  %1397 = vmatpush2.msra.mxu0 0.0
  %1398 = vmatprep.subr.mxu0 0.0
  %1399 = vmatpush2.msra.mxu0 0.0
  %1400 = vmatprep.subr.mxu0 0.0
  %1401 = vmatpush2.msra.mxu0 0.0
  %1402 = vmatprep.subr.mxu0 0.0
  %1403 = vmatpush2.msra.mxu0 0.0
  %1404 = vmatprep.mubr.f32.mxu0 0.0
  %1405 = vmatmul.mubr.f32.gmra.mxu0 %v1338
  %v1406 = vpop.f32.mrf.mxu0
  %v1407 = vadd.f32 %v144, %v1406
  %v1408 = vpop.f32.mrf.mxu0
  %1409 = vdwg.mxu0
  %v1410 = vtanh.pop %v1407
  %v1411 = vld [vmem:[%s6] sm:$0xff]
  %v1412 = vld [vmem:[%s6 + $0x8] sm:$0xff]
  %v1413 = vld [vmem:[%s6 + $0x10] sm:$0xff]
  %v1414 = vld [vmem:[%s6 + $0x18] sm:$0xff]
  %v1415 = vld [vmem:[#allocation2] sm:$0x1]
  %v1417 = vlaneseq
  %v1418 = vshrl.u32 %v1417, 7
  %v1419 = vsub.s32 0, %v1418
  %v1420 = vrot.slane %v1415, %v1419
  %v1423 = vsel %vm146, %v1410, 0
  %1425 = vmatprep.subr.mxu0 0.0
  %1426 = vmatpush1.msra.mxu0 0.0
  %1427 = vmatprep.subr.mxu0 0.0
  %1428 = vmatpush1.msra.mxu0 0.0
  %1429 = vmatprep.subr.mxu0 0.0
  %1430 = vmatpush1.msra.mxu0 0.0
  %1431 = vmatprep.subr.mxu0 0.0
  %1432 = vmatpush1.msra.mxu0 0.0
  %1433 = vmatprep.subr.mxu0 0.0
  %1434 = vmatpush1.msra.mxu0 0.0
  %1435 = vmatprep.subr.mxu0 0.0
  %1436 = vmatpush1.msra.mxu0 0.0
  %1437 = vmatprep.subr.mxu0 0.0
  %1438 = vmatpush1.msra.mxu0 0.0
  %1439 = vmatprep.subr.mxu0 0.0
  %1440 = vmatpush1.msra.mxu0 0.0
  %1441 = vmatprep.subr.mxu0 0.0
  %1442 = vmatpush1.msra.mxu0 0.0
  %1443 = vmatprep.subr.mxu0 0.0
  %1444 = vmatpush1.msra.mxu0 0.0
  %1445 = vmatprep.subr.mxu0 0.0
  %1446 = vmatpush1.msra.mxu0 0.0
  %1447 = vmatprep.subr.mxu0 0.0
  %1448 = vmatpush1.msra.mxu0 0.0
  %1449 = vmatprep.subr.mxu0 0.0
  %1450 = vmatpush1.msra.mxu0 %v1414
  %1451 = vmatprep.subr.mxu0 0.0
  %1452 = vmatpush1.msra.mxu0 %v1413
  %1453 = vmatprep.subr.mxu0 0.0
  %1454 = vmatpush1.msra.mxu0 %v1412
  %1455 = vmatprep.subr.mxu0 0.0
  %1456 = vmatpush1.msra.mxu0 %v1411
  %1457 = vmatprep.subr.mxu0 0.0
  %1458 = vmatpush2.msra.mxu0 0.0
  %1459 = vmatprep.subr.mxu0 0.0
  %1460 = vmatpush2.msra.mxu0 0.0
  %1461 = vmatprep.subr.mxu0 0.0
  %1462 = vmatpush2.msra.mxu0 0.0
  %1463 = vmatprep.subr.mxu0 0.0
  %1464 = vmatpush2.msra.mxu0 0.0
  %1465 = vmatprep.subr.mxu0 0.0
  %1466 = vmatpush2.msra.mxu0 0.0
  %1467 = vmatprep.subr.mxu0 0.0
  %1468 = vmatpush2.msra.mxu0 0.0
  %1469 = vmatprep.subr.mxu0 0.0
  %1470 = vmatpush2.msra.mxu0 0.0
  %1471 = vmatprep.subr.mxu0 0.0
  %1472 = vmatpush2.msra.mxu0 0.0
  %1473 = vmatprep.subr.mxu0 0.0
  %1474 = vmatpush2.msra.mxu0 0.0
  %1475 = vmatprep.subr.mxu0 0.0
  %1476 = vmatpush2.msra.mxu0 0.0
  %1477 = vmatprep.subr.mxu0 0.0
  %1478 = vmatpush2.msra.mxu0 0.0
  %1479 = vmatprep.subr.mxu0 0.0
  %1480 = vmatpush2.msra.mxu0 0.0
  %1481 = vmatprep.subr.mxu0 0.0
  %1482 = vmatpush2.msra.mxu0 0.0
  %1483 = vmatprep.subr.mxu0 0.0
  %1484 = vmatpush2.msra.mxu0 0.0
  %1485 = vmatprep.subr.mxu0 0.0
  %1486 = vmatpush2.msra.mxu0 0.0
  %1487 = vmatprep.subr.mxu0 0.0
  %1488 = vmatpush2.msra.mxu0 0.0
  %1489 = vmatprep.mubr.f32.mxu0 0.0
  %1490 = vmatmul.mubr.f32.gmra.mxu0 %v1423
  %v1491 = vpop.f32.mrf.mxu0
  %v1492 = vadd.f32 %v1420, %v1491
  %v1493 = vpop.f32.mrf.mxu0
  %1494 = vdwg.mxu0
  %vm1495 = vcmask 1024
  %1496 = vst.msk [vmem:[%s8] sm:$0x3] %vm1495, %v1492
  // Predicated region
  $region34: #{tpu_custom_call.1} parent=0 // pred_check
    _
  $region35: #{tpu_custom_call.1} parent=0 // pred_check_branch
    %1498 = sbr.rel (0) target = $region37
  $region36: #{tpu_custom_call.1} parent=0 // pred_region
    _
  $region37: #{tpu_custom_call.1} parent=0 // pred_fallthru
    _
  // Predicated region
  $region38: #{tpu_custom_call.1} parent=0 // pred_check
    _
  $region39: #{tpu_custom_call.1} parent=0 // pred_check_branch
    %1500 = sbr.rel (0) target = $region41
  $region40: #{tpu_custom_call.1} parent=0 // pred_region
    _
  $region41: #{tpu_custom_call.1} parent=0 // pred_fallthru
    _

</llo_original>
